<compile_context>
chip_gen: v7x
topology: tpu7x:2x2x1
jax: 0.10.0
libtpu: 0.0.40
codegen_flags: <defaults>
</compile_context>

<pallas_src>
import functools

import jax
import jax.numpy as jnp
from jax import lax
from jax.experimental import pallas as pl
from jax.experimental.pallas import tpu as pltpu


# ---------------------------------------------------------------------------
# VMEM budgeting & BlockSpec helpers
# ---------------------------------------------------------------------------
@functools.lru_cache(maxsize=None)
def _vmem_budget_bytes():
    """Scoped-VMEM budget ≈ 60% of physical VMEM (headroom for compiler scratch):
       v5e/v6e (128 MiB) -> ~76 MiB, v7x (64 MiB) -> ~38 MiB."""
    phys = 64 * 1024 * 1024
    try:
        phys = int(getattr(pltpu.get_tpu_info(), "vmem_capacity_bytes", phys))
    except Exception:
        pass
    return max(32 * 1024 * 1024, min(int(phys * 0.6), 96 * 1024 * 1024))


def _spec_1buf(shape, index_map):
    """BlockSpec with single buffering: constant / once-per-batch blocks are DMA'd once,
       so the default double buffer only wastes VMEM."""
    try:
        return pl.BlockSpec(shape, index_map, pipeline_mode=pl.Buffered(1))
    except TypeError:  # pipeline_mode unsupported -> fall back to default buffering
        return pl.BlockSpec(shape, index_map)


def _const_spec(shape):
    nd = len(shape)
    return _spec_1buf(shape, lambda *_, _nd=nd: (0,) * _nd)


def _pick_divisor_tile(n, target, align):
    """Largest divisor of n that is <= target and a multiple of `align`."""
    if n <= target:
        return n
    t = max(align, target - target % align)
    while t >= align:
        if n % t == 0:
            return t
        t -= align
    # TODO(synk): ragged-N tiles (masked bias rows) not implemented; fall back to full N.
    return n


def _choose_tile_padded(n, target, align):
    """Tile (multiple of `align`, <= target) plus the zero-padding of n that makes the
       tile divide it.  Prefers an exact divisor (pad == 0)."""
    target = max(align, min(n, target))
    target = max(align, target - target % align)
    n_pad = n if n % align == 0 else n + (align - n % align)
    t = target
    while t >= align:
        if n_pad % t == 0:
            return t, n_pad - n
        t -= align
    return align, n_pad - n


# ---------------------------------------------------------------------------
# Kernel 1: fused NL block (grid=(B,)).  Whole per-batch x stays resident in VMEM.
#   A = (phi^T @ g) / N  (Ci x Ci; the (N, N) f matrix is never formed)
#   z = BN3d_eval(W_z(theta @ A)) + x
# ---------------------------------------------------------------------------
def _nl_fused_kernel(x_ref, wt_ref, bt_ref, wp_ref, bp_ref, wg_ref, bg_ref,
                     wz_ref, bz_ref, s_ref, t_ref, z_ref, *, inv_n):
    x = x_ref[0]                                     # (N, C) compute dtype
    cdt = x.dtype
    phi = jnp.dot(x, wp_ref[...], preferred_element_type=jnp.float32) + bp_ref[...]
    g = jnp.dot(x, wg_ref[...], preferred_element_type=jnp.float32) + bg_ref[...]
    # phi^T @ g without materializing a transposed operand (contract dim 0 of both).
    # TODO(synk): on v6e/v7x verify with pl.lower_as_mlir that this does not insert an
    # XLU transpose of phi; if it does, switch to pl.dot(..., trans_a=True).
    a = lax.dot_general(phi.astype(cdt), g.astype(cdt), (((0,), (0,)), ((), ())),
                        preferred_element_type=jnp.float32) * inv_n
    theta = jnp.dot(x, wt_ref[...], preferred_element_type=jnp.float32) + bt_ref[...]
    y = jnp.dot(theta.astype(cdt), a.astype(cdt), preferred_element_type=jnp.float32)
    wy = jnp.dot(y.astype(cdt), wz_ref[...], preferred_element_type=jnp.float32) + bz_ref[...]
    wy = wy * s_ref[...] + t_ref[...]                # folded eval BatchNorm3d
    z_ref[0] = (wy + x.astype(jnp.float32)).astype(z_ref.dtype)   # residual connection


# ---------------------------------------------------------------------------
# Fallback kernels (two-pass, N tiled) for N*C too large to keep resident.
# ---------------------------------------------------------------------------
def _nl_reduce_kernel(x_ref, wp_ref, bp_ref, wg_ref, bg_ref, a_ref, acc_ref, *, inv_n):
    @pl.when(pl.program_id(1) == 0)
    def _init():
        acc_ref[...] = jnp.zeros_like(acc_ref)

    x = x_ref[0]                                     # (tileN, C)
    cdt = x.dtype
    phi = jnp.dot(x, wp_ref[...], preferred_element_type=jnp.float32) + bp_ref[...]
    g = jnp.dot(x, wg_ref[...], preferred_element_type=jnp.float32) + bg_ref[...]
    acc_ref[...] += lax.dot_general(phi.astype(cdt), g.astype(cdt),
                                    (((0,), (0,)), ((), ())),
                                    preferred_element_type=jnp.float32)

    @pl.when(pl.program_id(1) == pl.num_programs(1) - 1)
    def _finalize():
        # Emit A directly in the compute dtype: no f32 HBM round trip or extra cast kernel.
        a_ref[0] = (acc_ref[...] * inv_n).astype(a_ref.dtype)


def _nl_apply_kernel(x_ref, a_ref, wt_ref, bt_ref, wz_ref, bz_ref, s_ref, t_ref, z_ref):
    x = x_ref[0]                                     # (tileN, C)
    cdt = x.dtype
    theta = jnp.dot(x, wt_ref[...], preferred_element_type=jnp.float32) + bt_ref[...]
    y = jnp.dot(theta.astype(cdt), a_ref[0], preferred_element_type=jnp.float32)
    wy = jnp.dot(y.astype(cdt), wz_ref[...], preferred_element_type=jnp.float32) + bz_ref[...]
    wy = wy * s_ref[...] + t_ref[...]                # folded eval BatchNorm3d
    z_ref[0] = (wy + x.astype(jnp.float32)).astype(z_ref.dtype)


# ---------------------------------------------------------------------------
# Kernel: classifier head, streaming w1 over the F (=C*T*H*W) axis.
# ---------------------------------------------------------------------------
def _clf_kernel(z_ref, w1_ref, b1_ref, s_ref, t_ref, w2_ref, b2_ref, o_ref, acc_ref):
    @pl.when(pl.program_id(0) == 0)
    def _init():
        acc_ref[...] = jnp.zeros_like(acc_ref)

    acc_ref[...] += jnp.dot(z_ref[...], w1_ref[...], preferred_element_type=jnp.float32)

    @pl.when(pl.program_id(0) == pl.num_programs(0) - 1)
    def _finalize():
        h = acc_ref[...] + b1_ref[...]
        h = jnp.where(h > 0, h, 0.01 * h)            # LeakyReLU(0.01)
        h = h * s_ref[...] + t_ref[...]              # folded eval BatchNorm1d
        o = jnp.dot(h, w2_ref[...], preferred_element_type=jnp.float32) + b2_ref[...]
        o_ref[...] = jax.nn.sigmoid(o).astype(o_ref.dtype)


# ---------------------------------------------------------------------------
# Wrappers
# ---------------------------------------------------------------------------
def nl_block(x, p, *, tile_n_target=512, vmem_limit=None, nl_impl="auto"):
    """NLBlockND (mode='dot', dimension=3, bn_layer=True, eval).  x: [B, N, C]."""
    B, N, C = x.shape
    Cip = p["w_theta"].shape[1]                      # lane-padded inter-channel width
    cdt = x.dtype
    it = jnp.dtype(cdt).itemsize
    if vmem_limit is None:
        vmem_limit = _vmem_budget_bytes()

    if nl_impl == "auto":
        # Fused estimate: x+z blocks (double-buffered) + single-buffered projection
        # weights + f32 A (+ cast copy) + f32 phi/g/theta/y temporaries.
        fused_bytes = (2 * 2 * N * C * it
                       + (3 * C * Cip + Cip * C) * it
                       + 2 * Cip * Cip * 4
                       + 6 * N * Cip * 4)
        nl_impl = "fused" if fused_bytes <= int(vmem_limit * 0.8) else "tiled"

    if nl_impl == "fused":
        spec = pl.BlockSpec((1, N, C), lambda b: (b, 0, 0))
        return pl.pallas_call(
            functools.partial(_nl_fused_kernel, inv_n=1.0 / N),
            out_shape=jax.ShapeDtypeStruct((B, N, C), cdt),
            grid=(B,),
            in_specs=[
                spec,
                _const_spec((C, Cip)), _const_spec((1, Cip)),
                _const_spec((C, Cip)), _const_spec((1, Cip)),
                _const_spec((C, Cip)), _const_spec((1, Cip)),
                _const_spec((Cip, C)), _const_spec((1, C)),
                _const_spec((1, C)), _const_spec((1, C)),
            ],
            out_specs=spec,
            compiler_params=pltpu.CompilerParams(
                dimension_semantics=("parallel",),
                vmem_limit_bytes=vmem_limit),
        )(x, p["w_theta"], p["b_theta"], p["w_phi"], p["b_phi"], p["w_g"], p["b_g"],
          p["w_z"], p["b_z"], p["bn3_scale"], p["bn3_shift"])

    # ---- fallback: two-pass, N tiled -------------------------------------
    tile_n = _pick_divisor_tile(N, tile_n_target, 256 if N >= 512 else 16)
    nt = N // tile_n
    x_spec = pl.BlockSpec((1, tile_n, C), lambda b, n: (b, n, 0))

    # Pass 1: A[b] = (phi^T @ g) / N, accumulated in an f32 VMEM scratch, emitted in cdt.
    a = pl.pallas_call(
        functools.partial(_nl_reduce_kernel, inv_n=1.0 / N),
        out_shape=jax.ShapeDtypeStruct((B, Cip, Cip), cdt),
        grid=(B, nt),
        in_specs=[
            x_spec,
            _const_spec((C, Cip)), _const_spec((1, Cip)),
            _const_spec((C, Cip)), _const_spec((1, Cip)),
        ],
        out_specs=pl.BlockSpec((1, Cip, Cip), lambda b, n: (b, 0, 0)),
        scratch_shapes=[pltpu.VMEM((Cip, Cip), jnp.float32)],
        compiler_params=pltpu.CompilerParams(
            dimension_semantics=("parallel", "arbitrary"),
            vmem_limit_bytes=vmem_limit),
    )(x, p["w_phi"], p["b_phi"], p["w_g"], p["b_g"])

    # Pass 2: z = BN(W_z(theta @ A)) + x.  Both axes independent -> both "parallel".
    return pl.pallas_call(
        _nl_apply_kernel,
        out_shape=jax.ShapeDtypeStruct((B, N, C), cdt),
        grid=(B, nt),
        in_specs=[
            x_spec,
            _spec_1buf((1, Cip, Cip), lambda b, n: (b, 0, 0)),
            _const_spec((C, Cip)), _const_spec((1, Cip)),
            _const_spec((Cip, C)), _const_spec((1, C)),
            _const_spec((1, C)), _const_spec((1, C)),
        ],
        out_specs=x_spec,
        compiler_params=pltpu.CompilerParams(
            dimension_semantics=("parallel", "parallel"),
            vmem_limit_bytes=vmem_limit),
    )(x, a, p["w_theta"], p["b_theta"], p["w_z"], p["b_z"],
      p["bn3_scale"], p["bn3_shift"])


def classifier(z_flat, p, *, tile_f_target=None, vmem_limit=None):
    """Linear(F,64) -> LeakyReLU -> BN1d(eval) -> Linear(64,1) -> sigmoid, streaming w1."""
    B, F = z_flat.shape
    w1 = p["w1_perm"]
    Hh = w1.shape[1]
    if vmem_limit is None:
        vmem_limit = _vmem_budget_bytes()
    if tile_f_target is None:
        # ~4 grid steps over F: amortizes the ~0.35us/step grid overhead against the
        # w1 HBM stream that dominates this kernel.
        tile_f_target = max(4096, -(-F // 4))
    # VMEM cap per tile_f element: the (tile_f, 64) w1 block is lane-padded 64->128
    # (x2 buffers) plus the (B, tile_f) z block (x2 buffers); budget ~1/3 of the limit.
    itemsize = jnp.dtype(w1.dtype).itemsize
    cap = max(1024, (vmem_limit // 3) // (2 * (128 + B) * itemsize))
    tile_f, pad = _choose_tile_padded(F, min(tile_f_target, cap), 128)
    if pad:  # zero-pad the streamed axis (exact: zeros add nothing to the accumulator)
        z_flat = jnp.pad(z_flat, ((0, 0), (0, pad)))
        w1 = jnp.pad(w1, ((0, pad), (0, 0)))
    ft = (F + pad) // tile_f
    return pl.pallas_call(
        _clf_kernel,
        out_shape=jax.ShapeDtypeStruct((B, 1), jnp.float32),
        grid=(ft,),
        in_specs=[
            pl.BlockSpec((B, tile_f), lambda f: (0, f)),   # streamed, double-buffered
            pl.BlockSpec((tile_f, Hh), lambda f: (f, 0)),  # streamed w1, double-buffered
            _const_spec((1, Hh)), _const_spec((1, Hh)), _const_spec((1, Hh)),
            _const_spec((Hh, 1)), _const_spec((1, 1)),
        ],
        out_specs=pl.BlockSpec((B, 1), lambda f: (0, 0)),
        scratch_shapes=[pltpu.VMEM((B, Hh), jnp.float32)],
        compiler_params=pltpu.CompilerParams(
            dimension_semantics=("arbitrary",),
            vmem_limit_bytes=vmem_limit),
    )(z_flat, w1, p["b1"], p["bn1_scale"], p["bn1_shift"], p["w2"], p["b2"])


def prepare_params(p, compute_dtype):
    """One-time (offline) parameter prep:
       * zero-pad the inter-channel (Ci) lane dim up to a multiple of 128 (lane-dense MXU
         tiles; exact zeros so numerics are unchanged),
       * permute w1 rows from channel-major (PyTorch flatten of NCTHW) to n-major so the
         kernel-side flatten of [B, N, C] is a pure reshape (no inter-kernel transpose),
       * cast MXU operands to the compute dtype (bf16); biases / BN vectors stay f32.
       (The hidden dim 64 is NOT padded to 128 in HBM — that would double the w1 stream.)"""
    C, Ci = p["w_theta"].shape
    F, Hh = p["w1"].shape
    N = F // C
    Cip = ((Ci + 127) // 128) * 128
    pad_cols = [(0, 0), (0, Cip - Ci)]
    cdt = compute_dtype
    return {
        "w_theta": jnp.pad(p["w_theta"], pad_cols).astype(cdt),
        "w_phi":   jnp.pad(p["w_phi"], pad_cols).astype(cdt),
        "w_g":     jnp.pad(p["w_g"], pad_cols).astype(cdt),
        "b_theta": jnp.pad(p["b_theta"], pad_cols),
        "b_phi":   jnp.pad(p["b_phi"], pad_cols),
        "b_g":     jnp.pad(p["b_g"], pad_cols),
        "w_z":     jnp.pad(p["w_z"], [(0, Cip - Ci), (0, 0)]).astype(cdt),
        "b_z":     p["b_z"],
        "bn3_scale": p["bn3_scale"], "bn3_shift": p["bn3_shift"],
        # w1_perm[n*C + c] = w1[c*N + n]
        "w1_perm": p["w1"].reshape(C, N, Hh).transpose(1, 0, 2).reshape(N * C, Hh).astype(cdt),
        "b1": p["b1"], "bn1_scale": p["bn1_scale"], "bn1_shift": p["bn1_shift"],
        "w2": p["w2"], "b2": p["b2"],
    }


def r3d_attn_forward(feat_ncthw, params, compute_dtype=jnp.bfloat16, *,
                     tile_n_target=512, tile_f_target=None, nl_impl="auto"):
    """feat_ncthw: [B, C, T, H, W] backbone feature map (NCTHW, PyTorch layout)."""
    B, C, T, H, W = feat_ncthw.shape
    N = T * H * W
    vmem_limit = _vmem_budget_bytes()
    p = prepare_params(params, compute_dtype)
    # One-time layout conversion of the (frozen) backbone output: channels -> lane dim.
    x = feat_ncthw.reshape(B, C, N).transpose(0, 2, 1).astype(compute_dtype)   # [B, N, C]
    z = nl_block(x, p, tile_n_target=tile_n_target, vmem_limit=vmem_limit, nl_impl=nl_impl)
    # w1's rows were permuted to n-major at prepare time -> pure reshape, no transpose.
    z_flat = z.reshape(B, N * C)
    return classifier(z_flat, p, tile_f_target=tile_f_target, vmem_limit=vmem_limit)


# ---------------------------------------------------------------------------
# Deterministic synthetic parameters (shapes follow the module's __init__, scaled down:
# in_channels C, inter Ci=C//2, flatten F=C*T*H*W, hidden 64, out 1).  BatchNorm layers
# are folded into per-channel scale/shift (eval mode).
# ---------------------------------------------------------------------------
def init_params(key, C, Ci, F, hidden):
    ks = jax.random.split(key, 20)
    s = 0.05
    nrm = lambda k, shape, sc=s: (jax.random.normal(k, shape, jnp.float32) * sc)
    p = {
        "w_theta": nrm(ks[0], (C, Ci)), "b_theta": nrm(ks[1], (1, Ci)),
        "w_phi":   nrm(ks[2], (C, Ci)), "b_phi":   nrm(ks[3], (1, Ci)),
        "w_g":     nrm(ks[4], (C, Ci)), "b_g":     nrm(ks[5], (1, Ci)),
        "w_z":     nrm(ks[6], (Ci, C)), "b_z":     nrm(ks[7], (1, C)),
        "w1":      nrm(ks[8], (F, hidden), 0.02), "b1": nrm(ks[9], (1, hidden)),
        "w2":      nrm(ks[10], (hidden, 1)),      "b2": nrm(ks[11], (1, 1)),
    }
    eps = 1e-5
    g3 = 1.0 + 0.1 * jax.random.normal(ks[12], (C,), jnp.float32)
    b3 = 0.1 * jax.random.normal(ks[13], (C,), jnp.float32)
    m3 = 0.1 * jax.random.normal(ks[14], (C,), jnp.float32)
    v3 = 1.0 + 0.1 * jnp.abs(jax.random.normal(ks[15], (C,), jnp.float32))
    sc3 = g3 / jnp.sqrt(v3 + eps)
    p["bn3_scale"] = sc3.reshape(1, C)
    p["bn3_shift"] = (b3 - m3 * sc3).reshape(1, C)
    g1 = 1.0 + 0.1 * jax.random.normal(ks[16], (hidden,), jnp.float32)
    b1 = 0.1 * jax.random.normal(ks[17], (hidden,), jnp.float32)
    m1 = 0.1 * jax.random.normal(ks[18], (hidden,), jnp.float32)
    v1 = 1.0 + 0.1 * jnp.abs(jax.random.normal(ks[19], (hidden,), jnp.float32))
    sc1 = g1 / jnp.sqrt(v1 + eps)
    p["bn1_scale"] = sc1.reshape(1, hidden)
    p["bn1_shift"] = (b1 - m1 * sc1).reshape(1, hidden)
    return p


# Pure-JAX, f32, PyTorch-order reference (f-matrix path, channel-major flatten).
def reference(feat, p):
    B, C, T, H, W = feat.shape
    N = T * H * W
    x = feat.reshape(B, C, N).transpose(0, 2, 1)
    theta = x @ p["w_theta"] + p["b_theta"]
    phi = x @ p["w_phi"] + p["b_phi"]
    g = x @ p["w_g"] + p["b_g"]
    f = jnp.einsum("bnc,bmc->bnm", theta, phi) / N
    y = jnp.einsum("bnm,bmc->bnc", f, g)
    wy = (y @ p["w_z"] + p["b_z"]) * p["bn3_scale"] + p["bn3_shift"]
    z = wy + x
    z_flat = z.transpose(0, 2, 1).reshape(B, C * N)
    h = z_flat @ p["w1"] + p["b1"]
    h = jnp.where(h > 0, h, 0.01 * h)
    h = h * p["bn1_scale"] + p["bn1_shift"]
    return jax.nn.sigmoid(h @ p["w2"] + p["b2"])


if __name__ == "__main__":
    # Small shapes consistent with the module (in_channels C, inter C//2,
    # classifier flatten = C * T * H * W, hidden 64, output 1).
    B, C, T, H, W = 2, 64, 2, 4, 4
    Ci = C // 2
    N = T * H * W
    F = C * N
    hidden = 64

    key = jax.random.PRNGKey(0)
    k_feat, k_param = jax.random.split(key)
    feat = jax.random.normal(k_feat, (B, C, T, H, W), jnp.float32)
    params = init_params(k_param, C, Ci, F, hidden)

    ref = jax.block_until_ready(reference(feat, params))

    # f32 compute, fused NL path (the path taken at the module's real shapes).
    out_f32 = jax.block_until_ready(
        r3d_attn_forward(feat, params, compute_dtype=jnp.float32))
    assert out_f32.shape == (B, 1)
    assert jnp.allclose(out_f32, ref, rtol=1e-4, atol=1e-5), (out_f32, ref)

    # f32 compute, forced two-pass tiled NL path + multi-step streamed classifier
    # (exercises the N-reduction scratch accumulate and the cdt A hand-off).
    out_tiled = jax.block_until_ready(
        r3d_attn_forward(feat, params, compute_dtype=jnp.float32,
                         nl_impl="tiled", tile_n_target=16, tile_f_target=512))
    assert jnp.allclose(out_tiled, ref, rtol=1e-4, atol=1e-5), (out_tiled, ref)

    # bf16 compute path (performance config: bf16 MXU operands, f32 accumulation).
    out_bf16 = jax.block_until_ready(
        r3d_attn_forward(feat, params, compute_dtype=jnp.bfloat16))
    assert out_bf16.shape == (B, 1)
    assert jnp.allclose(out_bf16, ref, rtol=5e-2, atol=8e-3), (out_bf16, ref)

    # Awkward-N config (F=1600 not a multiple of 128): exercises the classifier's
    # exact zero-pad fallback on the streamed F axis.
    B2, T2, H2, W2 = 1, 1, 5, 5
    N2 = T2 * H2 * W2
    F2 = C * N2
    k_feat2, k_param2 = jax.random.split(jax.random.PRNGKey(1))
    feat2 = jax.random.normal(k_feat2, (B2, C, T2, H2, W2), jnp.float32)
    params2 = init_params(k_param2, C, Ci, F2, hidden)
    ref2 = jax.block_until_ready(reference(feat2, params2))
    out2 = jax.block_until_ready(
        r3d_attn_forward(feat2, params2, compute_dtype=jnp.float32))
    assert out2.shape == (B2, 1)
    assert jnp.allclose(out2, ref2, rtol=1e-4, atol=1e-5), (out2, ref2)

    print("KERNEL_OK")
</pallas_src>

<mosaic_0001>
module attributes {stable_mosaic.version = 11 : i64} {
  func.func @_nl_fused_kernel(%arg0: i32, %arg1: memref<1x32x64xf32, #tpu.memory_space<vmem>>, %arg2: memref<64x128xf32, #tpu.memory_space<vmem>>, %arg3: memref<1x128xf32, #tpu.memory_space<vmem>>, %arg4: memref<64x128xf32, #tpu.memory_space<vmem>>, %arg5: memref<1x128xf32, #tpu.memory_space<vmem>>, %arg6: memref<64x128xf32, #tpu.memory_space<vmem>>, %arg7: memref<1x128xf32, #tpu.memory_space<vmem>>, %arg8: memref<128x64xf32, #tpu.memory_space<vmem>>, %arg9: memref<1x64xf32, #tpu.memory_space<vmem>>, %arg10: memref<1x64xf32, #tpu.memory_space<vmem>>, %arg11: memref<1x64xf32, #tpu.memory_space<vmem>>, %arg12: memref<1x32x64xf32, #tpu.memory_space<vmem>>) attributes {dimension_semantics = [#tpu.dimension_semantics<parallel>], iteration_bounds = array<i64: 2>, scalar_prefetch = 0 : i64, scratch_operands = 0 : i64, tpu.core_type = #tpu.core_type<tc>, window_params = [{transform_indices = @transform_0, window_bounds = array<i64: 1, 32, 64>}, {pipeline_mode = #tpu.pipeline_mode<synchronous>, transform_indices = @transform_1, window_bounds = array<i64: 64, 128>}, {pipeline_mode = #tpu.pipeline_mode<synchronous>, transform_indices = @transform_2, window_bounds = array<i64: 1, 128>}, {pipeline_mode = #tpu.pipeline_mode<synchronous>, transform_indices = @transform_3, window_bounds = array<i64: 64, 128>}, {pipeline_mode = #tpu.pipeline_mode<synchronous>, transform_indices = @transform_4, window_bounds = array<i64: 1, 128>}, {pipeline_mode = #tpu.pipeline_mode<synchronous>, transform_indices = @transform_5, window_bounds = array<i64: 64, 128>}, {pipeline_mode = #tpu.pipeline_mode<synchronous>, transform_indices = @transform_6, window_bounds = array<i64: 1, 128>}, {pipeline_mode = #tpu.pipeline_mode<synchronous>, transform_indices = @transform_7, window_bounds = array<i64: 128, 64>}, {pipeline_mode = #tpu.pipeline_mode<synchronous>, transform_indices = @transform_8, window_bounds = array<i64: 1, 64>}, {pipeline_mode = #tpu.pipeline_mode<synchronous>, transform_indices = @transform_9, window_bounds = array<i64: 1, 64>}, {pipeline_mode = #tpu.pipeline_mode<synchronous>, transform_indices = @transform_10, window_bounds = array<i64: 1, 64>}, {transform_indices = @transform_11, window_bounds = array<i64: 1, 32, 64>}]} {
    %c0 = arith.constant 0 : index
    %c0_0 = arith.constant 0 : index
    %c0_1 = arith.constant 0 : index
    %0 = vector.load %arg1[%c0, %c0_0, %c0_1] : memref<1x32x64xf32, #tpu.memory_space<vmem>>, vector<1x32x64xf32>
    %1 = vector.shape_cast %0 : vector<1x32x64xf32> to vector<32x64xf32>
    %c0_2 = arith.constant 0 : index
    %c0_3 = arith.constant 0 : index
    %2 = vector.load %arg4[%c0_2, %c0_3] : memref<64x128xf32, #tpu.memory_space<vmem>>, vector<64x128xf32>
    %cst = arith.constant dense<0.000000e+00> : vector<32x128xf32>
    %3 = tpu.matmul %1, %2, %cst {dimension_numbers = #tpu.dot_dimension_numbers<[1], [0], [0], [1], [0, 0, 1, 1], [], []>} : vector<32x64xf32>, vector<64x128xf32>, vector<32x128xf32> -> vector<32x128xf32>
    %c0_4 = arith.constant 0 : index
    %c0_5 = arith.constant 0 : index
    %4 = vector.load %arg5[%c0_4, %c0_5] : memref<1x128xf32, #tpu.memory_space<vmem>>, vector<1x128xf32>
    %5 = vector.broadcast %4 : vector<1x128xf32> to vector<32x128xf32>
    %6 = arith.addf %3, %5 : vector<32x128xf32>
    %c0_6 = arith.constant 0 : index
    %c0_7 = arith.constant 0 : index
    %7 = vector.load %arg6[%c0_6, %c0_7] : memref<64x128xf32, #tpu.memory_space<vmem>>, vector<64x128xf32>
    %cst_8 = arith.constant dense<0.000000e+00> : vector<32x128xf32>
    %8 = tpu.matmul %1, %7, %cst_8 {dimension_numbers = #tpu.dot_dimension_numbers<[1], [0], [0], [1], [0, 0, 1, 1], [], []>} : vector<32x64xf32>, vector<64x128xf32>, vector<32x128xf32> -> vector<32x128xf32>
    %c0_9 = arith.constant 0 : index
    %c0_10 = arith.constant 0 : index
    %9 = vector.load %arg7[%c0_9, %c0_10] : memref<1x128xf32, #tpu.memory_space<vmem>>, vector<1x128xf32>
    %10 = vector.broadcast %9 : vector<1x128xf32> to vector<32x128xf32>
    %11 = arith.addf %8, %10 : vector<32x128xf32>
    %cst_11 = arith.constant dense<0.000000e+00> : vector<128x128xf32>
    %12 = tpu.matmul %6, %11, %cst_11 {dimension_numbers = #tpu.dot_dimension_numbers<[0], [0], [1], [1], [0, 1, 1, 1], [], []>} : vector<32x128xf32>, vector<32x128xf32>, vector<128x128xf32> -> vector<128x128xf32>
    %cst_12 = arith.constant 3.125000e-02 : f32
    %13 = vector.broadcast %cst_12 : f32 to vector<128x128xf32>
    %14 = arith.mulf %12, %13 : vector<128x128xf32>
    %c0_13 = arith.constant 0 : index
    %c0_14 = arith.constant 0 : index
    %15 = vector.load %arg2[%c0_13, %c0_14] : memref<64x128xf32, #tpu.memory_space<vmem>>, vector<64x128xf32>
    %cst_15 = arith.constant dense<0.000000e+00> : vector<32x128xf32>
    %16 = tpu.matmul %1, %15, %cst_15 {dimension_numbers = #tpu.dot_dimension_numbers<[1], [0], [0], [1], [0, 0, 1, 1], [], []>} : vector<32x64xf32>, vector<64x128xf32>, vector<32x128xf32> -> vector<32x128xf32>
    %c0_16 = arith.constant 0 : index
    %c0_17 = arith.constant 0 : index
    %17 = vector.load %arg3[%c0_16, %c0_17] : memref<1x128xf32, #tpu.memory_space<vmem>>, vector<1x128xf32>
    %18 = vector.broadcast %17 : vector<1x128xf32> to vector<32x128xf32>
    %19 = arith.addf %16, %18 : vector<32x128xf32>
    %cst_18 = arith.constant dense<0.000000e+00> : vector<32x128xf32>
    %20 = tpu.matmul %19, %14, %cst_18 {dimension_numbers = #tpu.dot_dimension_numbers<[1], [0], [0], [1], [0, 0, 1, 1], [], []>} : vector<32x128xf32>, vector<128x128xf32>, vector<32x128xf32> -> vector<32x128xf32>
    %c0_19 = arith.constant 0 : index
    %c0_20 = arith.constant 0 : index
    %21 = vector.load %arg8[%c0_19, %c0_20] : memref<128x64xf32, #tpu.memory_space<vmem>>, vector<128x64xf32>
    %cst_21 = arith.constant dense<0.000000e+00> : vector<32x64xf32>
    %22 = tpu.matmul %20, %21, %cst_21 {dimension_numbers = #tpu.dot_dimension_numbers<[1], [0], [0], [1], [0, 0, 1, 1], [], []>} : vector<32x128xf32>, vector<128x64xf32>, vector<32x64xf32> -> vector<32x64xf32>
    %c0_22 = arith.constant 0 : index
    %c0_23 = arith.constant 0 : index
    %23 = vector.load %arg9[%c0_22, %c0_23] : memref<1x64xf32, #tpu.memory_space<vmem>>, vector<1x64xf32>
    %24 = vector.broadcast %23 : vector<1x64xf32> to vector<32x64xf32>
    %25 = arith.addf %22, %24 : vector<32x64xf32>
    %c0_24 = arith.constant 0 : index
    %c0_25 = arith.constant 0 : index
    %26 = vector.load %arg10[%c0_24, %c0_25] : memref<1x64xf32, #tpu.memory_space<vmem>>, vector<1x64xf32>
    %27 = vector.broadcast %26 : vector<1x64xf32> to vector<32x64xf32>
    %28 = arith.mulf %25, %27 : vector<32x64xf32>
    %c0_26 = arith.constant 0 : index
    %c0_27 = arith.constant 0 : index
    %29 = vector.load %arg11[%c0_26, %c0_27] : memref<1x64xf32, #tpu.memory_space<vmem>>, vector<1x64xf32>
    %30 = vector.broadcast %29 : vector<1x64xf32> to vector<32x64xf32>
    %31 = arith.addf %28, %30 : vector<32x64xf32>
    %32 = arith.addf %31, %1 : vector<32x64xf32>
    %c0_28 = arith.constant 0 : index
    %c0_29 = arith.constant 0 : index
    %c0_30 = arith.constant 0 : index
    %33 = vector.load %arg12[%c0_28, %c0_29, %c0_30] : memref<1x32x64xf32, #tpu.memory_space<vmem>>, vector<1x32x64xf32>
    %34 = vector.shape_cast %33 : vector<1x32x64xf32> to vector<32x64xf32>
    %35 = vector.shape_cast %32 : vector<32x64xf32> to vector<1x32x64xf32>
    tpu.vector_store %arg12[%c0_28, %c0_29, %c0_30], %35 {strides = array<i32>} : memref<1x32x64xf32, #tpu.memory_space<vmem>>, vector<1x32x64xf32>,
    return
  }
  func.func @transform_0(%arg0: i32) -> (i32, i32, i32) {
    %c0_i32 = arith.constant 0 : i32
    %c0_i32_0 = arith.constant 0 : i32
    %c0_i32_1 = arith.constant 0 : i32
    return %arg0, %c0_i32, %c0_i32_0 : i32, i32, i32
  }
  func.func @transform_1(%arg0: i32) -> (i32, i32) {
    %c0_i32 = arith.constant 0 : i32
    %c0_i32_0 = arith.constant 0 : i32
    %c0_i32_1 = arith.constant 0 : i32
    return %c0_i32, %c0_i32_0 : i32, i32
  }
  func.func @transform_2(%arg0: i32) -> (i32, i32) {
    %c0_i32 = arith.constant 0 : i32
    %c0_i32_0 = arith.constant 0 : i32
    %c0_i32_1 = arith.constant 0 : i32
    return %c0_i32, %c0_i32_0 : i32, i32
  }
  func.func @transform_3(%arg0: i32) -> (i32, i32) {
    %c0_i32 = arith.constant 0 : i32
    %c0_i32_0 = arith.constant 0 : i32
    %c0_i32_1 = arith.constant 0 : i32
    return %c0_i32, %c0_i32_0 : i32, i32
  }
  func.func @transform_4(%arg0: i32) -> (i32, i32) {
    %c0_i32 = arith.constant 0 : i32
    %c0_i32_0 = arith.constant 0 : i32
    %c0_i32_1 = arith.constant 0 : i32
    return %c0_i32, %c0_i32_0 : i32, i32
  }
  func.func @transform_5(%arg0: i32) -> (i32, i32) {
    %c0_i32 = arith.constant 0 : i32
    %c0_i32_0 = arith.constant 0 : i32
    %c0_i32_1 = arith.constant 0 : i32
    return %c0_i32, %c0_i32_0 : i32, i32
  }
  func.func @transform_6(%arg0: i32) -> (i32, i32) {
    %c0_i32 = arith.constant 0 : i32
    %c0_i32_0 = arith.constant 0 : i32
    %c0_i32_1 = arith.constant 0 : i32
    return %c0_i32, %c0_i32_0 : i32, i32
  }
  func.func @transform_7(%arg0: i32) -> (i32, i32) {
    %c0_i32 = arith.constant 0 : i32
    %c0_i32_0 = arith.constant 0 : i32
    %c0_i32_1 = arith.constant 0 : i32
    return %c0_i32, %c0_i32_0 : i32, i32
  }
  func.func @transform_8(%arg0: i32) -> (i32, i32) {
    %c0_i32 = arith.constant 0 : i32
    %c0_i32_0 = arith.constant 0 : i32
    %c0_i32_1 = arith.constant 0 : i32
    return %c0_i32, %c0_i32_0 : i32, i32
  }
  func.func @transform_9(%arg0: i32) -> (i32, i32) {
    %c0_i32 = arith.constant 0 : i32
    %c0_i32_0 = arith.constant 0 : i32
    %c0_i32_1 = arith.constant 0 : i32
    return %c0_i32, %c0_i32_0 : i32, i32
  }
  func.func @transform_10(%arg0: i32) -> (i32, i32) {
    %c0_i32 = arith.constant 0 : i32
    %c0_i32_0 = arith.constant 0 : i32
    %c0_i32_1 = arith.constant 0 : i32
    return %c0_i32, %c0_i32_0 : i32, i32
  }
  func.func @transform_11(%arg0: i32) -> (i32, i32, i32) {
    %c0_i32 = arith.constant 0 : i32
    %c0_i32_0 = arith.constant 0 : i32
    %c0_i32_1 = arith.constant 0 : i32
    return %arg0, %c0_i32, %c0_i32_0 : i32, i32, i32
  }
}

</mosaic_0001>

<llo_original>
// kernel: tpu_custom_call.1
$region0: #{tpu_custom_call.1}
  #allocation0 [shape = 'u32[]', space=smem, size = 0x4, offset = 0x4, fixed_abs, tag = 'smem constant byte address 0x4 - core index']
  #allocation1 [shape = 'u32[144,128]{1,0:T(1,128)}', space=vmem, size = 0x12000, scoped, tag = 'internal scratch']
  %s0 = inlined_call_operand.vmem [shape: f32[2,32,64], index: 0, kind: input, shape index: {}]
  %s1 = inlined_call_operand.vmem [shape: f32[64,128], index: 1, kind: input, shape index: {}]
  %s2 = inlined_call_operand.vmem [shape: f32[1,128], index: 2, kind: input, shape index: {}]
  %s3 = inlined_call_operand.vmem [shape: f32[64,128], index: 3, kind: input, shape index: {}]
  %s4 = inlined_call_operand.vmem [shape: f32[1,128], index: 4, kind: input, shape index: {}]
  %s5 = inlined_call_operand.hbm [shape: f32[64,128], index: 5, kind: input, shape index: {}]
  %s6 = inlined_call_operand.vmem [shape: f32[1,128], index: 6, kind: input, shape index: {}]
  %s7 = inlined_call_operand.vmem [shape: f32[128,64], index: 7, kind: input, shape index: {}]
  %s8 = inlined_call_operand.vmem [shape: f32[1,64], index: 8, kind: input, shape index: {}]
  %s9 = inlined_call_operand.vmem [shape: f32[1,64], index: 9, kind: input, shape index: {}]
  %s10 = inlined_call_operand.vmem [shape: f32[1,64], index: 10, kind: input, shape index: {}]
  %s11 = inlined_call_operand.hbm [shape: f32[2,32,64], index: 11, kind: output, shape index: {}]
  %s12 = sld [smem:[#allocation0]]
  $region81: #{tpu_custom_call.1} parent=0
    _
  %s14 = ssub.s32 1, %s12
  %s15 = scalar_select 0, %s14, %s12
  $region1: #{tpu_custom_call.1} parent=0
    #allocation2 [shape = 'u8[32768]{0}', space=vmem, size = 0x8000, scoped, tag = 'input window, operand 5, single buffered']
    #allocation3 [shape = 's32[2]{0}', space=sflag, size = 0x8, scoped, tag = 'scoped memory for tpu_custom_call.1']
    #allocation4 [shape = 's32[2]{0}', space=sflag, size = 0x8, scoped, tag = 'scoped memory for tpu_custom_call.1']
    #allocation5 [shape = 'u8[32768]{0}', space=vmem, size = 0x8000, scoped, tag = 'output window, operand 0']
    %16 = vsyncpa [#allocation3], 0
    %17 = vsyncpa [#allocation4], 0
    %s18 = scalar_lea.sflag [#allocation4], 1
    %19 = vsyncpa %s18, 0
    loop: start=0, step=1, limit=4
    $region2: #{tpu_custom_call.1} parent=1 // loop_pre_header
      _
    $region3: #{tpu_custom_call.1} parent=1 // loop_header
      %s21 = sphi 0, %s25
      %p22 = scmp.ge.s32.totalorder %s21, 4
      %s31 = sphi 0, %s33
      %s34 = sphi 0, %s31
      %s35 = sphi 0, %s34
      %s51 = sphi 0, %s35
      %s55 = sphi 0, %s55
      %s57 = sphi 0, %s55
      %s58 = sphi 0, %s57
      %s72 = sphi 0, %s58
      %s76 = sphi 0, %s76
      %s78 = sphi 0, %s76
      %s79 = sphi 0, %s78
      %s93 = sphi 0, %s79
      %s97 = sphi 0, %s97
      %s99 = sphi 0, %s97
      %s100 = sphi 0, %s99
      %s114 = sphi 0, %s100
      %s118 = sphi 0, %s118
      %s120 = sphi 0, %s118
      %s121 = sphi 0, %s120
      %s135 = sphi 0, %s121
      %s139 = sphi 0, %s139
      %s141 = sphi 0, %s139
      %s142 = sphi 0, %s141
      %s156 = sphi 0, %s142
      %s160 = sphi 0, %s160
      %s162 = sphi 0, %s160
      %s163 = sphi 0, %s162
      %s177 = sphi 0, %s163
      %s181 = sphi 0, %s181
      %s183 = sphi 0, %s181
      %s184 = sphi 0, %s183
      %s198 = sphi 0, %s184
      %s202 = sphi 0, %s202
      %s204 = sphi 0, %s202
      %s205 = sphi 0, %s204
      %s219 = sphi 0, %s205
      %s223 = sphi 0, %s223
      %s225 = sphi 0, %s223
      %s226 = sphi 0, %s225
      %s240 = sphi 0, %s226
      %s244 = sphi 0, %s244
      %s246 = sphi 0, %s244
      %s247 = sphi 0, %s246
      %s261 = sphi 0, %s247
      %s267 = sphi 0, %s269
      %s270 = sphi 0, %s267
      %s271 = sphi 0, %s270
      %s287 = sphi 0, %s271
    $region4: #{tpu_custom_call.1} parent=1 // loop_header_branch
      %24 = sbr.rel (%p22) target = $region8
    $region5: #{tpu_custom_call.1} parent=1 // loop_body
      %s26 = ssub.s32 %s21, 1
      %s27 = ssub.s32 %s21, 2
      %s28 = sadd.s32 %s21, 1
      %s29 = ssub.s32 %s21, %s28
      %p30 = scmp.eq.s32.totalorder %s29, 0
      %s32 = sadd.s32 %s31, 1
      %s33 = scalar_select %p30, %s31, %s32
      %p36 = pneg %p30
      %p37 = scmp.eq.s32.totalorder %s21, 1
      %p38 = por %p36, %p37
      %p39 = scmp.ne.s32.totalorder %s31, %s34
      %p40 = scmp.eq.s32.totalorder %s21, 0
      %p41 = por %p39, %p40
      %p42 = scmp.ne.s32.totalorder %s31, %s34
      %p43 = scmp.eq.s32.totalorder %s26, 1
      %p44 = por %p42, %p43
      %p45 = scmp.ne.s32.totalorder %s34, %s35
      %p46 = scmp.eq.s32.totalorder %s26, 0
      %p47 = por %p45, %p46
      %p48 = scmp.ne.s32.totalorder %s34, %s35
      %p49 = scmp.eq.s32.totalorder %s27, 1
      %p50 = por %p48, %p49
      %p52 = scmp.ne.s32.totalorder %s35, %s51
      %p53 = scmp.eq.s32.totalorder %s27, 0
      %p54 = por %p52, %p53
      %s56 = sadd.s32 %s55, 1
      %p59 = scmp.eq.s32.totalorder %s21, 1
      %p60 = scmp.ne.s32.totalorder %s55, %s57
      %p61 = scmp.eq.s32.totalorder %s21, 0
      %p62 = por %p60, %p61
      %p63 = scmp.ne.s32.totalorder %s55, %s57
      %p64 = scmp.eq.s32.totalorder %s26, 1
      %p65 = por %p63, %p64
      %p66 = scmp.ne.s32.totalorder %s57, %s58
      %p67 = scmp.eq.s32.totalorder %s26, 0
      %p68 = por %p66, %p67
      %p69 = scmp.ne.s32.totalorder %s57, %s58
      %p70 = scmp.eq.s32.totalorder %s27, 1
      %p71 = por %p69, %p70
      %p73 = scmp.ne.s32.totalorder %s58, %s72
      %p74 = scmp.eq.s32.totalorder %s27, 0
      %p75 = por %p73, %p74
      %s77 = sadd.s32 %s76, 1
      %p80 = scmp.eq.s32.totalorder %s21, 1
      %p81 = scmp.ne.s32.totalorder %s76, %s78
      %p82 = scmp.eq.s32.totalorder %s21, 0
      %p83 = por %p81, %p82
      %p84 = scmp.ne.s32.totalorder %s76, %s78
      %p85 = scmp.eq.s32.totalorder %s26, 1
      %p86 = por %p84, %p85
      %p87 = scmp.ne.s32.totalorder %s78, %s79
      %p88 = scmp.eq.s32.totalorder %s26, 0
      %p89 = por %p87, %p88
      %p90 = scmp.ne.s32.totalorder %s78, %s79
      %p91 = scmp.eq.s32.totalorder %s27, 1
      %p92 = por %p90, %p91
      %p94 = scmp.ne.s32.totalorder %s79, %s93
      %p95 = scmp.eq.s32.totalorder %s27, 0
      %p96 = por %p94, %p95
      %s98 = sadd.s32 %s97, 1
      %p101 = scmp.eq.s32.totalorder %s21, 1
      %p102 = scmp.ne.s32.totalorder %s97, %s99
      %p103 = scmp.eq.s32.totalorder %s21, 0
      %p104 = por %p102, %p103
      %p105 = scmp.ne.s32.totalorder %s97, %s99
      %p106 = scmp.eq.s32.totalorder %s26, 1
      %p107 = por %p105, %p106
      %p108 = scmp.ne.s32.totalorder %s99, %s100
      %p109 = scmp.eq.s32.totalorder %s26, 0
      %p110 = por %p108, %p109
      %p111 = scmp.ne.s32.totalorder %s99, %s100
      %p112 = scmp.eq.s32.totalorder %s27, 1
      %p113 = por %p111, %p112
      %p115 = scmp.ne.s32.totalorder %s100, %s114
      %p116 = scmp.eq.s32.totalorder %s27, 0
      %p117 = por %p115, %p116
      %s119 = sadd.s32 %s118, 1
      %p122 = scmp.eq.s32.totalorder %s21, 1
      %p123 = scmp.ne.s32.totalorder %s118, %s120
      %p124 = scmp.eq.s32.totalorder %s21, 0
      %p125 = por %p123, %p124
      %p126 = scmp.ne.s32.totalorder %s118, %s120
      %p127 = scmp.eq.s32.totalorder %s26, 1
      %p128 = por %p126, %p127
      %p129 = scmp.ne.s32.totalorder %s120, %s121
      %p130 = scmp.eq.s32.totalorder %s26, 0
      %p131 = por %p129, %p130
      %p132 = scmp.ne.s32.totalorder %s120, %s121
      %p133 = scmp.eq.s32.totalorder %s27, 1
      %p134 = por %p132, %p133
      %p136 = scmp.ne.s32.totalorder %s121, %s135
      %p137 = scmp.eq.s32.totalorder %s27, 0
      %p138 = por %p136, %p137
      %s140 = sadd.s32 %s139, 1
      %p143 = scmp.eq.s32.totalorder %s21, 1
      %p144 = scmp.ne.s32.totalorder %s139, %s141
      %p145 = scmp.eq.s32.totalorder %s21, 0
      %p146 = por %p144, %p145
      %p147 = scmp.ne.s32.totalorder %s139, %s141
      %p148 = scmp.eq.s32.totalorder %s26, 1
      %p149 = por %p147, %p148
      %p150 = scmp.ne.s32.totalorder %s141, %s142
      %p151 = scmp.eq.s32.totalorder %s26, 0
      %p152 = por %p150, %p151
      %p153 = scmp.ne.s32.totalorder %s141, %s142
      %p154 = scmp.eq.s32.totalorder %s27, 1
      %p155 = por %p153, %p154
      %p157 = scmp.ne.s32.totalorder %s142, %s156
      %p158 = scmp.eq.s32.totalorder %s27, 0
      %p159 = por %p157, %p158
      %s161 = sadd.s32 %s160, 1
      %p164 = scmp.eq.s32.totalorder %s21, 1
      %p165 = scmp.ne.s32.totalorder %s160, %s162
      %p166 = scmp.eq.s32.totalorder %s21, 0
      %p167 = por %p165, %p166
      %p168 = scmp.ne.s32.totalorder %s160, %s162
      %p169 = scmp.eq.s32.totalorder %s26, 1
      %p170 = por %p168, %p169
      %p171 = scmp.ne.s32.totalorder %s162, %s163
      %p172 = scmp.eq.s32.totalorder %s26, 0
      %p173 = por %p171, %p172
      %p174 = scmp.ne.s32.totalorder %s162, %s163
      %p175 = scmp.eq.s32.totalorder %s27, 1
      %p176 = por %p174, %p175
      %p178 = scmp.ne.s32.totalorder %s163, %s177
      %p179 = scmp.eq.s32.totalorder %s27, 0
      %p180 = por %p178, %p179
      %s182 = sadd.s32 %s181, 1
      %p185 = scmp.eq.s32.totalorder %s21, 1
      %p186 = scmp.ne.s32.totalorder %s181, %s183
      %p187 = scmp.eq.s32.totalorder %s21, 0
      %p188 = por %p186, %p187
      %p189 = scmp.ne.s32.totalorder %s181, %s183
      %p190 = scmp.eq.s32.totalorder %s26, 1
      %p191 = por %p189, %p190
      %p192 = scmp.ne.s32.totalorder %s183, %s184
      %p193 = scmp.eq.s32.totalorder %s26, 0
      %p194 = por %p192, %p193
      %p195 = scmp.ne.s32.totalorder %s183, %s184
      %p196 = scmp.eq.s32.totalorder %s27, 1
      %p197 = por %p195, %p196
      %p199 = scmp.ne.s32.totalorder %s184, %s198
      %p200 = scmp.eq.s32.totalorder %s27, 0
      %p201 = por %p199, %p200
      %s203 = sadd.s32 %s202, 1
      %p206 = scmp.eq.s32.totalorder %s21, 1
      %p207 = scmp.ne.s32.totalorder %s202, %s204
      %p208 = scmp.eq.s32.totalorder %s21, 0
      %p209 = por %p207, %p208
      %p210 = scmp.ne.s32.totalorder %s202, %s204
      %p211 = scmp.eq.s32.totalorder %s26, 1
      %p212 = por %p210, %p211
      %p213 = scmp.ne.s32.totalorder %s204, %s205
      %p214 = scmp.eq.s32.totalorder %s26, 0
      %p215 = por %p213, %p214
      %p216 = scmp.ne.s32.totalorder %s204, %s205
      %p217 = scmp.eq.s32.totalorder %s27, 1
      %p218 = por %p216, %p217
      %p220 = scmp.ne.s32.totalorder %s205, %s219
      %p221 = scmp.eq.s32.totalorder %s27, 0
      %p222 = por %p220, %p221
      %s224 = sadd.s32 %s223, 1
      %p227 = scmp.eq.s32.totalorder %s21, 1
      %p228 = scmp.ne.s32.totalorder %s223, %s225
      %p229 = scmp.eq.s32.totalorder %s21, 0
      %p230 = por %p228, %p229
      %p231 = scmp.ne.s32.totalorder %s223, %s225
      %p232 = scmp.eq.s32.totalorder %s26, 1
      %p233 = por %p231, %p232
      %p234 = scmp.ne.s32.totalorder %s225, %s226
      %p235 = scmp.eq.s32.totalorder %s26, 0
      %p236 = por %p234, %p235
      %p237 = scmp.ne.s32.totalorder %s225, %s226
      %p238 = scmp.eq.s32.totalorder %s27, 1
      %p239 = por %p237, %p238
      %p241 = scmp.ne.s32.totalorder %s226, %s240
      %p242 = scmp.eq.s32.totalorder %s27, 0
      %p243 = por %p241, %p242
      %s245 = sadd.s32 %s244, 1
      %p248 = scmp.eq.s32.totalorder %s21, 1
      %p249 = scmp.ne.s32.totalorder %s244, %s246
      %p250 = scmp.eq.s32.totalorder %s21, 0
      %p251 = por %p249, %p250
      %p252 = scmp.ne.s32.totalorder %s244, %s246
      %p253 = scmp.eq.s32.totalorder %s26, 1
      %p254 = por %p252, %p253
      %p255 = scmp.ne.s32.totalorder %s246, %s247
      %p256 = scmp.eq.s32.totalorder %s26, 0
      %p257 = por %p255, %p256
      %p258 = scmp.ne.s32.totalorder %s246, %s247
      %p259 = scmp.eq.s32.totalorder %s27, 1
      %p260 = por %p258, %p259
      %p262 = scmp.ne.s32.totalorder %s247, %s261
      %p263 = scmp.eq.s32.totalorder %s27, 0
      %p264 = por %p262, %p263
      %s265 = ssub.s32 %s21, %s28
      %p266 = scmp.eq.s32.totalorder %s265, 0
      %s268 = sadd.s32 %s267, 1
      %s269 = scalar_select %p266, %s267, %s268
      %p272 = pneg %p266
      %p273 = scmp.eq.s32.totalorder %s21, 1
      %p274 = por %p272, %p273
      %p275 = scmp.ne.s32.totalorder %s267, %s270
      %p276 = scmp.eq.s32.totalorder %s21, 0
      %p277 = por %p275, %p276
      %p278 = scmp.ne.s32.totalorder %s267, %s270
      %p279 = scmp.eq.s32.totalorder %s26, 1
      %p280 = por %p278, %p279
      %p281 = scmp.ne.s32.totalorder %s270, %s271
      %p282 = scmp.eq.s32.totalorder %s26, 0
      %p283 = por %p281, %p282
      %p284 = scmp.ne.s32.totalorder %s270, %s271
      %p285 = scmp.eq.s32.totalorder %s27, 1
      %p286 = por %p284, %p285
      %p288 = scmp.ne.s32.totalorder %s271, %s287
      %p289 = scmp.eq.s32.totalorder %s27, 0
      %p290 = por %p288, %p289
      %p291 = scmp.le.s32.totalorder 1, %s21
      %p292 = scmp.lt.s32.totalorder %s21, 3
      %p293 = pnand %p291, %p292
      %p294 = pneg %p293
      // Predicated region
      $region9: #{tpu_custom_call.1} parent=5 // pred_check
        _
      $region10: #{tpu_custom_call.1} parent=5 // pred_check_branch
        %296 = sbr.rel (%p293) target = $region12
      $region11: #{tpu_custom_call.1} parent=5 // pred_region
        %s297 = ssub.s32 %s21, 1
        // Predicated region
        $region13: #{tpu_custom_call.1} parent=11 // pred_check
          %p298 = pneg %p68
        $region14: #{tpu_custom_call.1} parent=11 // pred_check_branch
          %300 = sbr.rel (%p298) target = $region16
        $region15: #{tpu_custom_call.1} parent=11 // pred_region
          _
        $region16: #{tpu_custom_call.1} parent=11 // pred_fallthru
          _
        // Predicated region
        $region17: #{tpu_custom_call.1} parent=11 // pred_check
          %p301 = pneg %p89
        $region18: #{tpu_custom_call.1} parent=11 // pred_check_branch
          %303 = sbr.rel (%p301) target = $region20
        $region19: #{tpu_custom_call.1} parent=11 // pred_region
          _
        $region20: #{tpu_custom_call.1} parent=11 // pred_fallthru
          _
        // Predicated region
        $region21: #{tpu_custom_call.1} parent=11 // pred_check
          %p304 = pneg %p110
        $region22: #{tpu_custom_call.1} parent=11 // pred_check_branch
          %306 = sbr.rel (%p304) target = $region24
        $region23: #{tpu_custom_call.1} parent=11 // pred_region
          _
        $region24: #{tpu_custom_call.1} parent=11 // pred_fallthru
          _
        // Predicated region
        $region25: #{tpu_custom_call.1} parent=11 // pred_check
          %p307 = pneg %p131
        $region26: #{tpu_custom_call.1} parent=11 // pred_check_branch
          %309 = sbr.rel (%p307) target = $region28
        $region27: #{tpu_custom_call.1} parent=11 // pred_region
          _
        $region28: #{tpu_custom_call.1} parent=11 // pred_fallthru
          _
        // Predicated region
        $region29: #{tpu_custom_call.1} parent=11 // pred_check
          %p310 = pneg %p152
        $region30: #{tpu_custom_call.1} parent=11 // pred_check_branch
          %312 = sbr.rel (%p310) target = $region32
        $region31: #{tpu_custom_call.1} parent=11 // pred_region
          %s314 = ssub.s32 1024, 1024
          %315 = vsyncadd [#allocation3], %s314
          %s316 = sshll.u32 [#allocation2], 4
          %s317 = int_to_ptr.vmem [resolvable:$true] %s316
          %322 = dma.hbm_to_vmem [thread:$0]  %s5, 1024, %s317, [#allocation3], 128, 128, 8
        $region32: #{tpu_custom_call.1} parent=11 // pred_fallthru
          _
        // Predicated region
        $region33: #{tpu_custom_call.1} parent=11 // pred_check
          %p323 = pneg %p173
        $region34: #{tpu_custom_call.1} parent=11 // pred_check_branch
          %325 = sbr.rel (%p323) target = $region36
        $region35: #{tpu_custom_call.1} parent=11 // pred_region
          _
        $region36: #{tpu_custom_call.1} parent=11 // pred_fallthru
          _
        // Predicated region
        $region37: #{tpu_custom_call.1} parent=11 // pred_check
          %p326 = pneg %p194
        $region38: #{tpu_custom_call.1} parent=11 // pred_check_branch
          %328 = sbr.rel (%p326) target = $region40
        $region39: #{tpu_custom_call.1} parent=11 // pred_region
          _
        $region40: #{tpu_custom_call.1} parent=11 // pred_fallthru
          _
        // Predicated region
        $region41: #{tpu_custom_call.1} parent=11 // pred_check
          %p329 = pneg %p215
        $region42: #{tpu_custom_call.1} parent=11 // pred_check_branch
          %331 = sbr.rel (%p329) target = $region44
        $region43: #{tpu_custom_call.1} parent=11 // pred_region
          _
        $region44: #{tpu_custom_call.1} parent=11 // pred_fallthru
          _
        // Predicated region
        $region45: #{tpu_custom_call.1} parent=11 // pred_check
          %p332 = pneg %p236
        $region46: #{tpu_custom_call.1} parent=11 // pred_check_branch
          %334 = sbr.rel (%p332) target = $region48
        $region47: #{tpu_custom_call.1} parent=11 // pred_region
          _
        $region48: #{tpu_custom_call.1} parent=11 // pred_fallthru
          _
        // Predicated region
        $region49: #{tpu_custom_call.1} parent=11 // pred_check
          %p335 = pneg %p257
        $region50: #{tpu_custom_call.1} parent=11 // pred_check_branch
          %337 = sbr.rel (%p335) target = $region52
        $region51: #{tpu_custom_call.1} parent=11 // pred_region
          _
        $region52: #{tpu_custom_call.1} parent=11 // pred_fallthru
          _
      $region12: #{tpu_custom_call.1} parent=5 // pred_fallthru
        _
      %p338 = scmp.lt.s32.totalorder %s21, 2
      // Predicated region
      $region53: #{tpu_custom_call.1} parent=5 // pred_check
        %p339 = pneg %p338
      $region54: #{tpu_custom_call.1} parent=5 // pred_check_branch
        %341 = sbr.rel (%p339) target = $region56
      $region55: #{tpu_custom_call.1} parent=5 // pred_region
        // Predicated region
        $region57: #{tpu_custom_call.1} parent=55 // pred_check
          %p342 = pneg %p41
        $region58: #{tpu_custom_call.1} parent=55 // pred_check_branch
          %344 = sbr.rel (%p342) target = $region60
        $region59: #{tpu_custom_call.1} parent=55 // pred_region
          %p345 = scmp.lt.s32.totalorder %s21, 1
          %s346 = scalar_select %p345, %s21, 1
          %s347 = smul.addr %s346, 4
          %s348 = smul.addr %s347, 8
          %s349 = scalar_lea.vmem %s0, %s348
        $region60: #{tpu_custom_call.1} parent=55 // pred_fallthru
          _
      $region56: #{tpu_custom_call.1} parent=5 // pred_fallthru
        _
      %p350 = scmp.le.s32.totalorder 1, %s21
      %p351 = scmp.lt.s32.totalorder %s21, 3
      %p352 = pnand %p350, %p351
      %p353 = pneg %p352
      // Predicated region
      $region61: #{tpu_custom_call.1} parent=5 // pred_check
        _
      $region62: #{tpu_custom_call.1} parent=5 // pred_check_branch
        %355 = sbr.rel (%p352) target = $region64
      $region63: #{tpu_custom_call.1} parent=5 // pred_region
        %s356 = ssub.s32 %s21, 1
        // Predicated region
        $region65: #{tpu_custom_call.1} parent=63 // pred_check
          %p357 = pneg %p152
        $region66: #{tpu_custom_call.1} parent=63 // pred_check_branch
          %359 = sbr.rel (%p357) target = $region68
        $region67: #{tpu_custom_call.1} parent=63 // pred_region
          %360 = dma.done [#allocation3], 1024
        $region68: #{tpu_custom_call.1} parent=63 // pred_fallthru
          _
        %p361 = scmp.lt.s32.totalorder %s26, 1
        %s362 = scalar_select %p361, %s26, 1
        %s363 = smul.addr %s362, 4
        %s364 = smul.addr %s363, 8
        %s365 = scalar_lea.vmem %s0, %s364
        %p366 = pneg %p47
        %p367 = pneg %p44
        %p368 = pneg %p68
        %p369 = pneg %p65
        %p370 = pneg %p89
        %p371 = pneg %p86
        %p372 = pneg %p110
        %p373 = pneg %p107
        %p374 = pneg %p131
        %p375 = pneg %p128
        %p376 = pneg %p152
        %p377 = pneg %p149
        %p378 = pneg %p173
        %p379 = pneg %p170
        %p380 = pneg %p194
        %p381 = pneg %p191
        %p382 = pneg %p215
        %p383 = pneg %p212
        %p384 = pneg %p236
        %p385 = pneg %p233
        %p386 = pneg %p257
        %p387 = pneg %p254
        %p388 = pneg %p283
        %p389 = pneg %p280
        %s390 = sand.u32 %s270, 1
        %s391 = scalar_lea.sflag [#allocation4], %s390
        %s392 = sand.u32 %s270, 1
        %s393 = smul.addr %s392, 32
        %s394 = scalar_lea.vmem [#allocation5], %s393
        %p395 = scmp.lt.s32.totalorder %s26, 1
        %s396 = scalar_select %p395, %s26, 1
        %s397 = smul.addr %s396, 4
        %s398 = smul.addr %s397, 8
        %s399 = scalar_lea.vmem %s0, %s398
        %v400 = vld [vmem:[%s399] sm:$0xff]
        %v401 = vld [vmem:[%s399 + $0x8] sm:$0xff]
        %v402 = vld [vmem:[%s399 + $0x10] sm:$0xff]
        %v403 = vld [vmem:[%s399 + $0x18] sm:$0xff]
        %v404 = vld [vmem:[%s3] sm:$0xff]
        %v405 = vld [vmem:[%s3 + $0x8] sm:$0xff]
        %v406 = vld [vmem:[%s3 + $0x10] sm:$0xff]
        %v407 = vld [vmem:[%s3 + $0x18] sm:$0xff]
        %v408 = vld [vmem:[%s3 + $0x20] sm:$0xff]
        %v409 = vld [vmem:[%s3 + $0x28] sm:$0xff]
        %v410 = vld [vmem:[%s3 + $0x30] sm:$0xff]
        %v411 = vld [vmem:[%s3 + $0x38] sm:$0xff]
        %v412 = vld [vmem:[%s4] sm:$0x1]
        %v414 = vlaneseq
        %v415 = vshrl.u32 %v414, 7
        %v416 = vsub.s32 0, %v415
        %v417 = vrot.slane %v412, %v416
        %vm419 = vcmask 523264
        %v421 = vsel %vm419, %v400, 0
        %v424 = vsel %vm419, %v401, 0
        %v427 = vsel %vm419, %v402, 0
        %v430 = vsel %vm419, %v403, 0
        %432 = vmatprep.subr.mxu0 0.0
        %433 = vmatpush1.msra.mxu0 %v404
        %434 = vmatprep.subr.mxu0 0.0
        %435 = vmatpush1.msra.mxu0 %v405
        %436 = vmatprep.subr.mxu0 0.0
        %437 = vmatpush1.msra.mxu0 %v406
        %438 = vmatprep.subr.mxu0 0.0
        %439 = vmatpush1.msra.mxu0 %v407
        %440 = vmatprep.subr.mxu0 0.0
        %441 = vmatpush1.msra.mxu0 %v408
        %442 = vmatprep.subr.mxu0 0.0
        %443 = vmatpush1.msra.mxu0 %v409
        %444 = vmatprep.subr.mxu0 0.0
        %445 = vmatpush1.msra.mxu0 %v410
        %446 = vmatprep.subr.mxu0 0.0
        %447 = vmatpush1.msra.mxu0 %v411
        %448 = vmatprep.subr.mxu0 0.0
        %449 = vmatpush1.msra.mxu0 0.0
        %450 = vmatprep.subr.mxu0 0.0
        %451 = vmatpush1.msra.mxu0 0.0
        %452 = vmatprep.subr.mxu0 0.0
        %453 = vmatpush1.msra.mxu0 0.0
        %454 = vmatprep.subr.mxu0 0.0
        %455 = vmatpush1.msra.mxu0 0.0
        %456 = vmatprep.subr.mxu0 0.0
        %457 = vmatpush1.msra.mxu0 0.0
        %458 = vmatprep.subr.mxu0 0.0
        %459 = vmatpush1.msra.mxu0 0.0
        %460 = vmatprep.subr.mxu0 0.0
        %461 = vmatpush1.msra.mxu0 0.0
        %462 = vmatprep.subr.mxu0 0.0
        %463 = vmatpush1.msra.mxu0 0.0
        %464 = vmatprep.subr.mxu0 0.0
        %465 = vmatpush1.msra.mxu0 0.0
        %466 = vmatprep.subr.mxu0 0.0
        %467 = vmatpush1.msra.mxu0 0.0
        %468 = vmatprep.subr.mxu0 0.0
        %469 = vmatpush1.msra.mxu0 0.0
        %470 = vmatprep.subr.mxu0 0.0
        %471 = vmatpush1.msra.mxu0 0.0
        %472 = vmatprep.subr.mxu0 0.0
        %473 = vmatpush1.msra.mxu0 0.0
        %474 = vmatprep.subr.mxu0 0.0
        %475 = vmatpush1.msra.mxu0 0.0
        %476 = vmatprep.subr.mxu0 0.0
        %477 = vmatpush1.msra.mxu0 0.0
        %478 = vmatprep.subr.mxu0 0.0
        %479 = vmatpush1.msra.mxu0 0.0
        %480 = vmatprep.subr.mxu0 0.0
        %481 = vmatpush1.msra.mxu0 0.0
        %482 = vmatprep.subr.mxu0 0.0
        %483 = vmatpush1.msra.mxu0 0.0
        %484 = vmatprep.subr.mxu0 0.0
        %485 = vmatpush1.msra.mxu0 0.0
        %486 = vmatprep.subr.mxu0 0.0
        %487 = vmatpush1.msra.mxu0 0.0
        %488 = vmatprep.subr.mxu0 0.0
        %489 = vmatpush1.msra.mxu0 0.0
        %490 = vmatprep.subr.mxu0 0.0
        %491 = vmatpush1.msra.mxu0 0.0
        %492 = vmatprep.subr.mxu0 0.0
        %493 = vmatpush1.msra.mxu0 0.0
        %494 = vmatprep.subr.mxu0 0.0
        %495 = vmatpush1.msra.mxu0 0.0
        %496 = vmatprep.mubr.f32.mxu0 0.0
        %497 = vmatmul.mubr.f32.gmra.mrb[0].mxu0 %v421
        %v498 = vpop.f32.mrb[0].mxu0
        %v499 = vadd.f32 %v417, %v498
        %v500 = vpop.f32.mrb[0].mxu0
        %501 = vmatprep.mubr.f32.mxu0 0.0
        %502 = vmatmul.mubr.f32.gmra.mrb[0].mxu0 %v424
        %v503 = vpop.f32.mrb[0].mxu0
        %v504 = vadd.f32 %v417, %v503
        %v505 = vpop.f32.mrb[0].mxu0
        %506 = vmatprep.mubr.f32.mxu0 0.0
        %507 = vmatmul.mubr.f32.gmra.mrb[0].mxu0 %v427
        %v508 = vpop.f32.mrb[0].mxu0
        %v509 = vadd.f32 %v417, %v508
        %v510 = vpop.f32.mrb[0].mxu0
        %511 = vmatprep.mubr.f32.mxu0 0.0
        %512 = vmatmul.mubr.f32.gmra.mrb[0].mxu0 %v430
        %v513 = vpop.f32.mrb[0].mxu0
        %v514 = vadd.f32 %v417, %v513
        %v515 = vpop.f32.mrb[0].mxu0
        %516 = vdwg.mxu0
        %v517 = vld [vmem:[#allocation2] sm:$0xff]
        %v518 = vld [vmem:[#allocation2 + $0x8] sm:$0xff]
        %v519 = vld [vmem:[#allocation2 + $0x10] sm:$0xff]
        %v520 = vld [vmem:[#allocation2 + $0x18] sm:$0xff]
        %v521 = vld [vmem:[#allocation2 + $0x20] sm:$0xff]
        %v522 = vld [vmem:[#allocation2 + $0x28] sm:$0xff]
        %v523 = vld [vmem:[#allocation2 + $0x30] sm:$0xff]
        %v524 = vld [vmem:[#allocation2 + $0x38] sm:$0xff]
        %v525 = vld [vmem:[%s6] sm:$0x1]
        %v527 = vlaneseq
        %v528 = vshrl.u32 %v527, 7
        %v529 = vsub.s32 0, %v528
        %v530 = vrot.slane %v525, %v529
        %532 = vmatprep.subr.mxu0 0.0
        %533 = vmatpush1.msra.mxu0 %v517
        %534 = vmatprep.subr.mxu0 0.0
        %535 = vmatpush1.msra.mxu0 %v518
        %536 = vmatprep.subr.mxu0 0.0
        %537 = vmatpush1.msra.mxu0 %v519
        %538 = vmatprep.subr.mxu0 0.0
        %539 = vmatpush1.msra.mxu0 %v520
        %540 = vmatprep.subr.mxu0 0.0
        %541 = vmatpush1.msra.mxu0 %v521
        %542 = vmatprep.subr.mxu0 0.0
        %543 = vmatpush1.msra.mxu0 %v522
        %544 = vmatprep.subr.mxu0 0.0
        %545 = vmatpush1.msra.mxu0 %v523
        %546 = vmatprep.subr.mxu0 0.0
        %547 = vmatpush1.msra.mxu0 %v524
        %548 = vmatprep.subr.mxu0 0.0
        %549 = vmatpush1.msra.mxu0 0.0
        %550 = vmatprep.subr.mxu0 0.0
        %551 = vmatpush1.msra.mxu0 0.0
        %552 = vmatprep.subr.mxu0 0.0
        %553 = vmatpush1.msra.mxu0 0.0
        %554 = vmatprep.subr.mxu0 0.0
        %555 = vmatpush1.msra.mxu0 0.0
        %556 = vmatprep.subr.mxu0 0.0
        %557 = vmatpush1.msra.mxu0 0.0
        %558 = vmatprep.subr.mxu0 0.0
        %559 = vmatpush1.msra.mxu0 0.0
        %560 = vmatprep.subr.mxu0 0.0
        %561 = vmatpush1.msra.mxu0 0.0
        %562 = vmatprep.subr.mxu0 0.0
        %563 = vmatpush1.msra.mxu0 0.0
        %564 = vmatprep.subr.mxu0 0.0
        %565 = vmatpush1.msra.mxu0 0.0
        %566 = vmatprep.subr.mxu0 0.0
        %567 = vmatpush1.msra.mxu0 0.0
        %568 = vmatprep.subr.mxu0 0.0
        %569 = vmatpush1.msra.mxu0 0.0
        %570 = vmatprep.subr.mxu0 0.0
        %571 = vmatpush1.msra.mxu0 0.0
        %572 = vmatprep.subr.mxu0 0.0
        %573 = vmatpush1.msra.mxu0 0.0
        %574 = vmatprep.subr.mxu0 0.0
        %575 = vmatpush1.msra.mxu0 0.0
        %576 = vmatprep.subr.mxu0 0.0
        %577 = vmatpush1.msra.mxu0 0.0
        %578 = vmatprep.subr.mxu0 0.0
        %579 = vmatpush1.msra.mxu0 0.0
        %580 = vmatprep.subr.mxu0 0.0
        %581 = vmatpush1.msra.mxu0 0.0
        %582 = vmatprep.subr.mxu0 0.0
        %583 = vmatpush1.msra.mxu0 0.0
        %584 = vmatprep.subr.mxu0 0.0
        %585 = vmatpush1.msra.mxu0 0.0
        %586 = vmatprep.subr.mxu0 0.0
        %587 = vmatpush1.msra.mxu0 0.0
        %588 = vmatprep.subr.mxu0 0.0
        %589 = vmatpush1.msra.mxu0 0.0
        %590 = vmatprep.subr.mxu0 0.0
        %591 = vmatpush1.msra.mxu0 0.0
        %592 = vmatprep.subr.mxu0 0.0
        %593 = vmatpush1.msra.mxu0 0.0
        %594 = vmatprep.subr.mxu0 0.0
        %595 = vmatpush1.msra.mxu0 0.0
        %596 = vmatprep.mubr.f32.mxu0 0.0
        %597 = vmatmul.mubr.f32.gmra.mrb[0].mxu0 %v421
        %v598 = vpop.f32.mrb[0].mxu0
        %v599 = vadd.f32 %v530, %v598
        %v600 = vpop.f32.mrb[0].mxu0
        %601 = vmatprep.mubr.f32.mxu0 0.0
        %602 = vmatmul.mubr.f32.gmra.mrb[0].mxu0 %v424
        %v603 = vpop.f32.mrb[0].mxu0
        %v604 = vadd.f32 %v530, %v603
        %v605 = vpop.f32.mrb[0].mxu0
        %606 = vmatprep.mubr.f32.mxu0 0.0
        %607 = vmatmul.mubr.f32.gmra.mrb[0].mxu0 %v427
        %v608 = vpop.f32.mrb[0].mxu0
        %v609 = vadd.f32 %v530, %v608
        %v610 = vpop.f32.mrb[0].mxu0
        %611 = vmatprep.mubr.f32.mxu0 0.0
        %612 = vmatmul.mubr.f32.gmra.mrb[0].mxu0 %v430
        %v613 = vpop.f32.mrb[0].mxu0
        %v614 = vadd.f32 %v530, %v613
        %v615 = vpop.f32.mrb[0].mxu0
        %616 = vdwg.mxu0
        %617 = vxpose.xlu0.b32.start [1/16] %v499, 128
        %618 = vxpose.xlu0.b32.cont [2/16] %v504, 128
        %619 = vxpose.xlu0.b32.cont [3/16] %v509, 128
        %620 = vxpose.xlu0.b32.cont [4/16] %v514, 128
        %621 = vxpose.xlu0.b32.cont [5/16] 0.0, 128
        %622 = vxpose.xlu0.b32.cont [6/16] 0.0, 128
        %623 = vxpose.xlu0.b32.cont [7/16] 0.0, 128
        %624 = vxpose.xlu0.b32.cont [8/16] 0.0, 128
        %625 = vxpose.xlu0.b32.cont [9/16] 0.0, 128
        %626 = vxpose.xlu0.b32.cont [10/16] 0.0, 128
        %627 = vxpose.xlu0.b32.cont [11/16] 0.0, 128
        %628 = vxpose.xlu0.b32.cont [12/16] 0.0, 128
        %629 = vxpose.xlu0.b32.cont [13/16] 0.0, 128
        %630 = vxpose.xlu0.b32.cont [14/16] 0.0, 128
        %631 = vxpose.xlu0.b32.cont [15/16] 0.0, 128
        %632 = vxpose.xlu0.b32.end [16/16] 0.0, 128
        %v633 = vpop.trf.xlu0
        %v634 = vpop.trf.xlu0
        %v635 = vpop.trf.xlu0
        %v636 = vpop.trf.xlu0
        %v637 = vpop.trf.xlu0
        %v638 = vpop.trf.xlu0
        %v639 = vpop.trf.xlu0
        %v640 = vpop.trf.xlu0
        %v641 = vpop.trf.xlu0
        %v642 = vpop.trf.xlu0
        %v643 = vpop.trf.xlu0
        %v644 = vpop.trf.xlu0
        %v645 = vpop.trf.xlu0
        %v646 = vpop.trf.xlu0
        %v647 = vpop.trf.xlu0
        %v648 = vpop.trf.xlu0
        %vm649 = vcmask 261120
        %v651 = vsel %vm649, %v633, 0
        %v654 = vsel %vm649, %v634, 0
        %v657 = vsel %vm649, %v635, 0
        %v660 = vsel %vm649, %v636, 0
        %v663 = vsel %vm649, %v637, 0
        %v666 = vsel %vm649, %v638, 0
        %v669 = vsel %vm649, %v639, 0
        %v672 = vsel %vm649, %v640, 0
        %v675 = vsel %vm649, %v641, 0
        %v678 = vsel %vm649, %v642, 0
        %v681 = vsel %vm649, %v643, 0
        %v684 = vsel %vm649, %v644, 0
        %v687 = vsel %vm649, %v645, 0
        %v690 = vsel %vm649, %v646, 0
        %v693 = vsel %vm649, %v647, 0
        %v696 = vsel %vm649, %v648, 0
        %698 = vmatprep.subr.mxu0 0.0
        %699 = vmatpush1.msra.mxu0 %v599
        %700 = vmatprep.subr.mxu0 0.0
        %701 = vmatpush1.msra.mxu0 %v604
        %702 = vmatprep.subr.mxu0 0.0
        %703 = vmatpush1.msra.mxu0 %v609
        %704 = vmatprep.subr.mxu0 0.0
        %705 = vmatpush1.msra.mxu0 %v614
        %706 = vmatprep.subr.mxu0 0.0
        %707 = vmatpush1.msra.mxu0 0.0
        %708 = vmatprep.subr.mxu0 0.0
        %709 = vmatpush1.msra.mxu0 0.0
        %710 = vmatprep.subr.mxu0 0.0
        %711 = vmatpush1.msra.mxu0 0.0
        %712 = vmatprep.subr.mxu0 0.0
        %713 = vmatpush1.msra.mxu0 0.0
        %714 = vmatprep.subr.mxu0 0.0
        %715 = vmatpush1.msra.mxu0 0.0
        %716 = vmatprep.subr.mxu0 0.0
        %717 = vmatpush1.msra.mxu0 0.0
        %718 = vmatprep.subr.mxu0 0.0
        %719 = vmatpush1.msra.mxu0 0.0
        %720 = vmatprep.subr.mxu0 0.0
        %721 = vmatpush1.msra.mxu0 0.0
        %722 = vmatprep.subr.mxu0 0.0
        %723 = vmatpush1.msra.mxu0 0.0
        %724 = vmatprep.subr.mxu0 0.0
        %725 = vmatpush1.msra.mxu0 0.0
        %726 = vmatprep.subr.mxu0 0.0
        %727 = vmatpush1.msra.mxu0 0.0
        %728 = vmatprep.subr.mxu0 0.0
        %729 = vmatpush1.msra.mxu0 0.0
        %730 = vmatprep.subr.mxu0 0.0
        %731 = vmatpush1.msra.mxu0 0.0
        %732 = vmatprep.subr.mxu0 0.0
        %733 = vmatpush1.msra.mxu0 0.0
        %734 = vmatprep.subr.mxu0 0.0
        %735 = vmatpush1.msra.mxu0 0.0
        %736 = vmatprep.subr.mxu0 0.0
        %737 = vmatpush1.msra.mxu0 0.0
        %738 = vmatprep.subr.mxu0 0.0
        %739 = vmatpush1.msra.mxu0 0.0
        %740 = vmatprep.subr.mxu0 0.0
        %741 = vmatpush1.msra.mxu0 0.0
        %742 = vmatprep.subr.mxu0 0.0
        %743 = vmatpush1.msra.mxu0 0.0
        %744 = vmatprep.subr.mxu0 0.0
        %745 = vmatpush1.msra.mxu0 0.0
        %746 = vmatprep.subr.mxu0 0.0
        %747 = vmatpush1.msra.mxu0 0.0
        %748 = vmatprep.subr.mxu0 0.0
        %749 = vmatpush1.msra.mxu0 0.0
        %750 = vmatprep.subr.mxu0 0.0
        %751 = vmatpush1.msra.mxu0 0.0
        %752 = vmatprep.subr.mxu0 0.0
        %753 = vmatpush1.msra.mxu0 0.0
        %754 = vmatprep.subr.mxu0 0.0
        %755 = vmatpush1.msra.mxu0 0.0
        %756 = vmatprep.subr.mxu0 0.0
        %757 = vmatpush1.msra.mxu0 0.0
        %758 = vmatprep.subr.mxu0 0.0
        %759 = vmatpush1.msra.mxu0 0.0
        %760 = vmatprep.subr.mxu0 0.0
        %761 = vmatpush1.msra.mxu0 0.0
        %762 = vmatprep.mubr.f32.mxu0 0.0
        %763 = vmatmul.mubr.f32.gmra.mrb[0].mxu0 %v651
        %v764 = vpop.f32.mrb[0].mxu0
        %v765 = vadd.f32 0.0, %v764
        %v766 = vpop.f32.mrb[0].mxu0
        %767 = vmatprep.mubr.f32.mxu0 0.0
        %768 = vmatmul.mubr.f32.gmra.mrb[0].mxu0 %v654
        %v769 = vpop.f32.mrb[0].mxu0
        %v770 = vadd.f32 0.0, %v769
        %v771 = vpop.f32.mrb[0].mxu0
        %772 = vmatprep.mubr.f32.mxu0 0.0
        %773 = vmatmul.mubr.f32.gmra.mrb[0].mxu0 %v657
        %v774 = vpop.f32.mrb[0].mxu0
        %v775 = vadd.f32 0.0, %v774
        %v776 = vpop.f32.mrb[0].mxu0
        %777 = vmatprep.mubr.f32.mxu0 0.0
        %778 = vmatmul.mubr.f32.gmra.mrb[0].mxu0 %v660
        %v779 = vpop.f32.mrb[0].mxu0
        %v780 = vadd.f32 0.0, %v779
        %v781 = vpop.f32.mrb[0].mxu0
        %782 = vmatprep.mubr.f32.mxu0 0.0
        %783 = vmatmul.mubr.f32.gmra.mrb[0].mxu0 %v663
        %v784 = vpop.f32.mrb[0].mxu0
        %v785 = vadd.f32 0.0, %v784
        %v786 = vpop.f32.mrb[0].mxu0
        %787 = vmatprep.mubr.f32.mxu0 0.0
        %788 = vmatmul.mubr.f32.gmra.mrb[0].mxu0 %v666
        %v789 = vpop.f32.mrb[0].mxu0
        %v790 = vadd.f32 0.0, %v789
        %v791 = vpop.f32.mrb[0].mxu0
        %792 = vmatprep.mubr.f32.mxu0 0.0
        %793 = vmatmul.mubr.f32.gmra.mrb[0].mxu0 %v669
        %v794 = vpop.f32.mrb[0].mxu0
        %v795 = vadd.f32 0.0, %v794
        %v796 = vpop.f32.mrb[0].mxu0
        %797 = vmatprep.mubr.f32.mxu0 0.0
        %798 = vmatmul.mubr.f32.gmra.mrb[0].mxu0 %v672
        %v799 = vpop.f32.mrb[0].mxu0
        %v800 = vadd.f32 0.0, %v799
        %v801 = vpop.f32.mrb[0].mxu0
        %802 = vmatprep.mubr.f32.mxu0 0.0
        %803 = vmatmul.mubr.f32.gmra.mrb[0].mxu0 %v675
        %v804 = vpop.f32.mrb[0].mxu0
        %v805 = vadd.f32 0.0, %v804
        %v806 = vpop.f32.mrb[0].mxu0
        %807 = vmatprep.mubr.f32.mxu0 0.0
        %808 = vmatmul.mubr.f32.gmra.mrb[0].mxu0 %v678
        %v809 = vpop.f32.mrb[0].mxu0
        %v810 = vadd.f32 0.0, %v809
        %v811 = vpop.f32.mrb[0].mxu0
        %812 = vmatprep.mubr.f32.mxu0 0.0
        %813 = vmatmul.mubr.f32.gmra.mrb[0].mxu0 %v681
        %v814 = vpop.f32.mrb[0].mxu0
        %v815 = vadd.f32 0.0, %v814
        %v816 = vpop.f32.mrb[0].mxu0
        %817 = vmatprep.mubr.f32.mxu0 0.0
        %818 = vmatmul.mubr.f32.gmra.mrb[0].mxu0 %v684
        %v819 = vpop.f32.mrb[0].mxu0
        %v820 = vadd.f32 0.0, %v819
        %v821 = vpop.f32.mrb[0].mxu0
        %822 = vmatprep.mubr.f32.mxu0 0.0
        %823 = vmatmul.mubr.f32.gmra.mrb[0].mxu0 %v687
        %v824 = vpop.f32.mrb[0].mxu0
        %v825 = vadd.f32 0.0, %v824
        %v826 = vpop.f32.mrb[0].mxu0
        %827 = vmatprep.mubr.f32.mxu0 0.0
        %828 = vmatmul.mubr.f32.gmra.mrb[0].mxu0 %v690
        %v829 = vpop.f32.mrb[0].mxu0
        %v830 = vadd.f32 0.0, %v829
        %v831 = vpop.f32.mrb[0].mxu0
        %832 = vmatprep.mubr.f32.mxu0 0.0
        %833 = vmatmul.mubr.f32.gmra.mrb[0].mxu0 %v693
        %v834 = vpop.f32.mrb[0].mxu0
        %v835 = vadd.f32 0.0, %v834
        %v836 = vpop.f32.mrb[0].mxu0
        %837 = vmatprep.mubr.f32.mxu0 0.0
        %838 = vmatmul.mubr.f32.gmra.mrb[0].mxu0 %v696
        %v839 = vpop.f32.mrb[0].mxu0
        %v840 = vadd.f32 0.0, %v839
        %v841 = vpop.f32.mrb[0].mxu0
        %842 = vdwg.mxu0
        %v843 = vmul.f32 %v765, 0.03125
        %v844 = vmul.f32 %v770, 0.03125
        %v845 = vmul.f32 %v775, 0.03125
        %v846 = vmul.f32 %v780, 0.03125
        %v847 = vmul.f32 %v785, 0.03125
        %v848 = vmul.f32 %v790, 0.03125
        %v849 = vmul.f32 %v795, 0.03125
        %v850 = vmul.f32 %v800, 0.03125
        %v851 = vmul.f32 %v805, 0.03125
        %v852 = vmul.f32 %v810, 0.03125
        %v853 = vmul.f32 %v815, 0.03125
        %v854 = vmul.f32 %v820, 0.03125
        %v855 = vmul.f32 %v825, 0.03125
        %v856 = vmul.f32 %v830, 0.03125
        %v857 = vmul.f32 %v835, 0.03125
        %v858 = vmul.f32 %v840, 0.03125
        %v859 = vld [vmem:[%s1] sm:$0xff]
        %v860 = vld [vmem:[%s1 + $0x8] sm:$0xff]
        %v861 = vld [vmem:[%s1 + $0x10] sm:$0xff]
        %v862 = vld [vmem:[%s1 + $0x18] sm:$0xff]
        %v863 = vld [vmem:[%s1 + $0x20] sm:$0xff]
        %v864 = vld [vmem:[%s1 + $0x28] sm:$0xff]
        %v865 = vld [vmem:[%s1 + $0x30] sm:$0xff]
        %v866 = vld [vmem:[%s1 + $0x38] sm:$0xff]
        %v867 = vld [vmem:[%s2] sm:$0x1]
        %v869 = vlaneseq
        %v870 = vshrl.u32 %v869, 7
        %v871 = vsub.s32 0, %v870
        %v872 = vrot.slane %v867, %v871
        %874 = vmatprep.subr.mxu0 0.0
        %875 = vmatpush1.msra.mxu0 %v859
        %876 = vmatprep.subr.mxu0 0.0
        %877 = vmatpush1.msra.mxu0 %v860
        %878 = vmatprep.subr.mxu0 0.0
        %879 = vmatpush1.msra.mxu0 %v861
        %880 = vmatprep.subr.mxu0 0.0
        %881 = vmatpush1.msra.mxu0 %v862
        %882 = vmatprep.subr.mxu0 0.0
        %883 = vmatpush1.msra.mxu0 %v863
        %884 = vmatprep.subr.mxu0 0.0
        %885 = vmatpush1.msra.mxu0 %v864
        %886 = vmatprep.subr.mxu0 0.0
        %887 = vmatpush1.msra.mxu0 %v865
        %888 = vmatprep.subr.mxu0 0.0
        %889 = vmatpush1.msra.mxu0 %v866
        %890 = vmatprep.subr.mxu0 0.0
        %891 = vmatpush1.msra.mxu0 0.0
        %892 = vmatprep.subr.mxu0 0.0
        %893 = vmatpush1.msra.mxu0 0.0
        %894 = vmatprep.subr.mxu0 0.0
        %895 = vmatpush1.msra.mxu0 0.0
        %896 = vmatprep.subr.mxu0 0.0
        %897 = vmatpush1.msra.mxu0 0.0
        %898 = vmatprep.subr.mxu0 0.0
        %899 = vmatpush1.msra.mxu0 0.0
        %900 = vmatprep.subr.mxu0 0.0
        %901 = vmatpush1.msra.mxu0 0.0
        %902 = vmatprep.subr.mxu0 0.0
        %903 = vmatpush1.msra.mxu0 0.0
        %904 = vmatprep.subr.mxu0 0.0
        %905 = vmatpush1.msra.mxu0 0.0
        %906 = vmatprep.subr.mxu0 0.0
        %907 = vmatpush1.msra.mxu0 0.0
        %908 = vmatprep.subr.mxu0 0.0
        %909 = vmatpush1.msra.mxu0 0.0
        %910 = vmatprep.subr.mxu0 0.0
        %911 = vmatpush1.msra.mxu0 0.0
        %912 = vmatprep.subr.mxu0 0.0
        %913 = vmatpush1.msra.mxu0 0.0
        %914 = vmatprep.subr.mxu0 0.0
        %915 = vmatpush1.msra.mxu0 0.0
        %916 = vmatprep.subr.mxu0 0.0
        %917 = vmatpush1.msra.mxu0 0.0
        %918 = vmatprep.subr.mxu0 0.0
        %919 = vmatpush1.msra.mxu0 0.0
        %920 = vmatprep.subr.mxu0 0.0
        %921 = vmatpush1.msra.mxu0 0.0
        %922 = vmatprep.subr.mxu0 0.0
        %923 = vmatpush1.msra.mxu0 0.0
        %924 = vmatprep.subr.mxu0 0.0
        %925 = vmatpush1.msra.mxu0 0.0
        %926 = vmatprep.subr.mxu0 0.0
        %927 = vmatpush1.msra.mxu0 0.0
        %928 = vmatprep.subr.mxu0 0.0
        %929 = vmatpush1.msra.mxu0 0.0
        %930 = vmatprep.subr.mxu0 0.0
        %931 = vmatpush1.msra.mxu0 0.0
        %932 = vmatprep.subr.mxu0 0.0
        %933 = vmatpush1.msra.mxu0 0.0
        %934 = vmatprep.subr.mxu0 0.0
        %935 = vmatpush1.msra.mxu0 0.0
        %936 = vmatprep.subr.mxu0 0.0
        %937 = vmatpush1.msra.mxu0 0.0
        %938 = vmatprep.mubr.f32.mxu0 0.0
        %939 = vmatmul.mubr.f32.gmra.mrb[0].mxu0 %v421
        %v940 = vpop.f32.mrb[0].mxu0
        %v941 = vadd.f32 %v872, %v940
        %v942 = vpop.f32.mrb[0].mxu0
        %943 = vmatprep.mubr.f32.mxu0 0.0
        %944 = vmatmul.mubr.f32.gmra.mrb[0].mxu0 %v424
        %v945 = vpop.f32.mrb[0].mxu0
        %v946 = vadd.f32 %v872, %v945
        %v947 = vpop.f32.mrb[0].mxu0
        %948 = vmatprep.mubr.f32.mxu0 0.0
        %949 = vmatmul.mubr.f32.gmra.mrb[0].mxu0 %v427
        %v950 = vpop.f32.mrb[0].mxu0
        %v951 = vadd.f32 %v872, %v950
        %v952 = vpop.f32.mrb[0].mxu0
        %953 = vmatprep.mubr.f32.mxu0 0.0
        %954 = vmatmul.mubr.f32.gmra.mrb[0].mxu0 %v430
        %v955 = vpop.f32.mrb[0].mxu0
        %v956 = vadd.f32 %v872, %v955
        %v957 = vpop.f32.mrb[0].mxu0
        %958 = vdwg.mxu0
        %959 = vmatprep.subr.mxu0 0.0
        %960 = vmatpush1.msra.mxu0 %v843
        %961 = vmatprep.subr.mxu0 0.0
        %962 = vmatpush1.msra.mxu0 %v844
        %963 = vmatprep.subr.mxu0 0.0
        %964 = vmatpush1.msra.mxu0 %v845
        %965 = vmatprep.subr.mxu0 0.0
        %966 = vmatpush1.msra.mxu0 %v846
        %967 = vmatprep.subr.mxu0 0.0
        %968 = vmatpush1.msra.mxu0 %v847
        %969 = vmatprep.subr.mxu0 0.0
        %970 = vmatpush1.msra.mxu0 %v848
        %971 = vmatprep.subr.mxu0 0.0
        %972 = vmatpush1.msra.mxu0 %v849
        %973 = vmatprep.subr.mxu0 0.0
        %974 = vmatpush1.msra.mxu0 %v850
        %975 = vmatprep.subr.mxu0 0.0
        %976 = vmatpush1.msra.mxu0 %v851
        %977 = vmatprep.subr.mxu0 0.0
        %978 = vmatpush1.msra.mxu0 %v852
        %979 = vmatprep.subr.mxu0 0.0
        %980 = vmatpush1.msra.mxu0 %v853
        %981 = vmatprep.subr.mxu0 0.0
        %982 = vmatpush1.msra.mxu0 %v854
        %983 = vmatprep.subr.mxu0 0.0
        %984 = vmatpush1.msra.mxu0 %v855
        %985 = vmatprep.subr.mxu0 0.0
        %986 = vmatpush1.msra.mxu0 %v856
        %987 = vmatprep.subr.mxu0 0.0
        %988 = vmatpush1.msra.mxu0 %v857
        %989 = vmatprep.subr.mxu0 0.0
        %990 = vmatpush1.msra.mxu0 %v858
        %991 = vmatprep.subr.mxu0 0.0
        %992 = vmatpush1.msra.mxu0 0.0
        %993 = vmatprep.subr.mxu0 0.0
        %994 = vmatpush1.msra.mxu0 0.0
        %995 = vmatprep.subr.mxu0 0.0
        %996 = vmatpush1.msra.mxu0 0.0
        %997 = vmatprep.subr.mxu0 0.0
        %998 = vmatpush1.msra.mxu0 0.0
        %999 = vmatprep.subr.mxu0 0.0
        %1000 = vmatpush1.msra.mxu0 0.0
        %1001 = vmatprep.subr.mxu0 0.0
        %1002 = vmatpush1.msra.mxu0 0.0
        %1003 = vmatprep.subr.mxu0 0.0
        %1004 = vmatpush1.msra.mxu0 0.0
        %1005 = vmatprep.subr.mxu0 0.0
        %1006 = vmatpush1.msra.mxu0 0.0
        %1007 = vmatprep.subr.mxu0 0.0
        %1008 = vmatpush1.msra.mxu0 0.0
        %1009 = vmatprep.subr.mxu0 0.0
        %1010 = vmatpush1.msra.mxu0 0.0
        %1011 = vmatprep.subr.mxu0 0.0
        %1012 = vmatpush1.msra.mxu0 0.0
        %1013 = vmatprep.subr.mxu0 0.0
        %1014 = vmatpush1.msra.mxu0 0.0
        %1015 = vmatprep.subr.mxu0 0.0
        %1016 = vmatpush1.msra.mxu0 0.0
        %1017 = vmatprep.subr.mxu0 0.0
        %1018 = vmatpush1.msra.mxu0 0.0
        %1019 = vmatprep.subr.mxu0 0.0
        %1020 = vmatpush1.msra.mxu0 0.0
        %1021 = vmatprep.subr.mxu0 0.0
        %1022 = vmatpush1.msra.mxu0 0.0
        %1023 = vmatprep.mubr.f32.mxu0 0.0
        %1024 = vmatmul.mubr.f32.gmra.mrb[0].mxu0 %v941
        %v1025 = vpop.f32.mrb[0].mxu0
        %v1026 = vadd.f32 0.0, %v1025
        %v1027 = vpop.f32.mrb[0].mxu0
        %1028 = vmatprep.mubr.f32.mxu0 0.0
        %1029 = vmatmul.mubr.f32.gmra.mrb[0].mxu0 %v946
        %v1030 = vpop.f32.mrb[0].mxu0
        %v1031 = vadd.f32 0.0, %v1030
        %v1032 = vpop.f32.mrb[0].mxu0
        %1033 = vmatprep.mubr.f32.mxu0 0.0
        %1034 = vmatmul.mubr.f32.gmra.mrb[0].mxu0 %v951
        %v1035 = vpop.f32.mrb[0].mxu0
        %v1036 = vadd.f32 0.0, %v1035
        %v1037 = vpop.f32.mrb[0].mxu0
        %1038 = vmatprep.mubr.f32.mxu0 0.0
        %1039 = vmatmul.mubr.f32.gmra.mrb[0].mxu0 %v956
        %v1040 = vpop.f32.mrb[0].mxu0
        %v1041 = vadd.f32 0.0, %v1040
        %v1042 = vpop.f32.mrb[0].mxu0
        %1043 = vdwg.mxu0
        %v1044 = vld [vmem:[%s7] sm:$0xff]
        %v1045 = vld [vmem:[%s7 + $0x8] sm:$0xff]
        %v1046 = vld [vmem:[%s7 + $0x10] sm:$0xff]
        %v1047 = vld [vmem:[%s7 + $0x18] sm:$0xff]
        %v1048 = vld [vmem:[%s7 + $0x20] sm:$0xff]
        %v1049 = vld [vmem:[%s7 + $0x28] sm:$0xff]
        %v1050 = vld [vmem:[%s7 + $0x30] sm:$0xff]
        %v1051 = vld [vmem:[%s7 + $0x38] sm:$0xff]
        %v1052 = vld [vmem:[%s7 + $0x40] sm:$0xff]
        %v1053 = vld [vmem:[%s7 + $0x48] sm:$0xff]
        %v1054 = vld [vmem:[%s7 + $0x50] sm:$0xff]
        %v1055 = vld [vmem:[%s7 + $0x58] sm:$0xff]
        %v1056 = vld [vmem:[%s7 + $0x60] sm:$0xff]
        %v1057 = vld [vmem:[%s7 + $0x68] sm:$0xff]
        %v1058 = vld [vmem:[%s7 + $0x70] sm:$0xff]
        %v1059 = vld [vmem:[%s7 + $0x78] sm:$0xff]
        %v1060 = vld [vmem:[%s8] sm:$0x1]
        %v1062 = vlaneseq
        %v1063 = vshrl.u32 %v1062, 7
        %v1064 = vsub.s32 0, %v1063
        %v1065 = vrot.slane %v1060, %v1064
        %1067 = vmatprep.subr.mxu0 0.0
        %1068 = vmatpush1.msra.mxu0 %v1044
        %1069 = vmatprep.subr.mxu0 0.0
        %1070 = vmatpush1.msra.mxu0 %v1045
        %1071 = vmatprep.subr.mxu0 0.0
        %1072 = vmatpush1.msra.mxu0 %v1046
        %1073 = vmatprep.subr.mxu0 0.0
        %1074 = vmatpush1.msra.mxu0 %v1047
        %1075 = vmatprep.subr.mxu0 0.0
        %1076 = vmatpush1.msra.mxu0 %v1048
        %1077 = vmatprep.subr.mxu0 0.0
        %1078 = vmatpush1.msra.mxu0 %v1049
        %1079 = vmatprep.subr.mxu0 0.0
        %1080 = vmatpush1.msra.mxu0 %v1050
        %1081 = vmatprep.subr.mxu0 0.0
        %1082 = vmatpush1.msra.mxu0 %v1051
        %1083 = vmatprep.subr.mxu0 0.0
        %1084 = vmatpush1.msra.mxu0 %v1052
        %1085 = vmatprep.subr.mxu0 0.0
        %1086 = vmatpush1.msra.mxu0 %v1053
        %1087 = vmatprep.subr.mxu0 0.0
        %1088 = vmatpush1.msra.mxu0 %v1054
        %1089 = vmatprep.subr.mxu0 0.0
        %1090 = vmatpush1.msra.mxu0 %v1055
        %1091 = vmatprep.subr.mxu0 0.0
        %1092 = vmatpush1.msra.mxu0 %v1056
        %1093 = vmatprep.subr.mxu0 0.0
        %1094 = vmatpush1.msra.mxu0 %v1057
        %1095 = vmatprep.subr.mxu0 0.0
        %1096 = vmatpush1.msra.mxu0 %v1058
        %1097 = vmatprep.subr.mxu0 0.0
        %1098 = vmatpush1.msra.mxu0 %v1059
        %1099 = vmatprep.subr.mxu0 0.0
        %1100 = vmatpush1.msra.mxu0 0.0
        %1101 = vmatprep.subr.mxu0 0.0
        %1102 = vmatpush1.msra.mxu0 0.0
        %1103 = vmatprep.subr.mxu0 0.0
        %1104 = vmatpush1.msra.mxu0 0.0
        %1105 = vmatprep.subr.mxu0 0.0
        %1106 = vmatpush1.msra.mxu0 0.0
        %1107 = vmatprep.subr.mxu0 0.0
        %1108 = vmatpush1.msra.mxu0 0.0
        %1109 = vmatprep.subr.mxu0 0.0
        %1110 = vmatpush1.msra.mxu0 0.0
        %1111 = vmatprep.subr.mxu0 0.0
        %1112 = vmatpush1.msra.mxu0 0.0
        %1113 = vmatprep.subr.mxu0 0.0
        %1114 = vmatpush1.msra.mxu0 0.0
        %1115 = vmatprep.subr.mxu0 0.0
        %1116 = vmatpush1.msra.mxu0 0.0
        %1117 = vmatprep.subr.mxu0 0.0
        %1118 = vmatpush1.msra.mxu0 0.0
        %1119 = vmatprep.subr.mxu0 0.0
        %1120 = vmatpush1.msra.mxu0 0.0
        %1121 = vmatprep.subr.mxu0 0.0
        %1122 = vmatpush1.msra.mxu0 0.0
        %1123 = vmatprep.subr.mxu0 0.0
        %1124 = vmatpush1.msra.mxu0 0.0
        %1125 = vmatprep.subr.mxu0 0.0
        %1126 = vmatpush1.msra.mxu0 0.0
        %1127 = vmatprep.subr.mxu0 0.0
        %1128 = vmatpush1.msra.mxu0 0.0
        %1129 = vmatprep.subr.mxu0 0.0
        %1130 = vmatpush1.msra.mxu0 0.0
        %1131 = vmatprep.mubr.f32.mxu0 0.0
        %1132 = vmatmul.mubr.f32.gmra.mrb[0].mxu0 %v1026
        %v1133 = vpop.f32.mrb[0].mxu0
        %v1134 = vadd.f32 %v1065, %v1133
        %v1135 = vpop.f32.mrb[0].mxu0
        %1136 = vmatprep.mubr.f32.mxu0 0.0
        %1137 = vmatmul.mubr.f32.gmra.mrb[0].mxu0 %v1031
        %v1138 = vpop.f32.mrb[0].mxu0
        %v1139 = vadd.f32 %v1065, %v1138
        %v1140 = vpop.f32.mrb[0].mxu0
        %1141 = vmatprep.mubr.f32.mxu0 0.0
        %1142 = vmatmul.mubr.f32.gmra.mrb[0].mxu0 %v1036
        %v1143 = vpop.f32.mrb[0].mxu0
        %v1144 = vadd.f32 %v1065, %v1143
        %v1145 = vpop.f32.mrb[0].mxu0
        %1146 = vmatprep.mubr.f32.mxu0 0.0
        %1147 = vmatmul.mubr.f32.gmra.mrb[0].mxu0 %v1041
        %v1148 = vpop.f32.mrb[0].mxu0
        %v1149 = vadd.f32 %v1065, %v1148
        %v1150 = vpop.f32.mrb[0].mxu0
        %1151 = vdwg.mxu0
        %v1152 = vld [vmem:[%s9] sm:$0x1]
        %v1154 = vlaneseq
        %v1155 = vshrl.u32 %v1154, 7
        %v1156 = vsub.s32 0, %v1155
        %v1157 = vrot.slane %v1152, %v1156
        %v1159 = vmul.f32 %v1134, %v1157
        %v1160 = vmul.f32 %v1139, %v1157
        %v1161 = vmul.f32 %v1144, %v1157
        %v1162 = vmul.f32 %v1149, %v1157
        %v1163 = vld [vmem:[%s10] sm:$0x1]
        %v1165 = vlaneseq
        %v1166 = vshrl.u32 %v1165, 7
        %v1167 = vsub.s32 0, %v1166
        %v1168 = vrot.slane %v1163, %v1167
        %v1170 = vadd.f32 %v1159, %v1168
        %v1171 = vadd.f32 %v1160, %v1168
        %v1172 = vadd.f32 %v1161, %v1168
        %v1173 = vadd.f32 %v1162, %v1168
        %v1174 = vadd.f32 %v1170, %v400
        %v1175 = vadd.f32 %v1171, %v401
        %v1176 = vadd.f32 %v1172, %v402
        %v1177 = vadd.f32 %v1173, %v403
        %1178 = vst.msk [vmem:[%s394] sm:$0xff] %vm419, %v1174
        %1179 = vst.msk [vmem:[%s394 + $0x8] sm:$0xff] %vm419, %v1175
        %1180 = vst.msk [vmem:[%s394 + $0x10] sm:$0xff] %vm419, %v1176
        %1181 = vst.msk [vmem:[%s394 + $0x18] sm:$0xff] %vm419, %v1177
        %s1182 = sand.u32 %s270, 1
        %s1183 = scalar_lea.sflag [#allocation4], %s1182
        %s1184 = sand.u32 %s270, 1
        %s1185 = smul.addr %s1184, 32
        %s1186 = scalar_lea.vmem [#allocation5], %s1185
        // Predicated region
        $region69: #{tpu_custom_call.1} parent=63 // pred_check
          %p1187 = pneg %p280
        $region70: #{tpu_custom_call.1} parent=63 // pred_check_branch
          %1189 = sbr.rel (%p1187) target = $region72
        $region71: #{tpu_custom_call.1} parent=63 // pred_region
          %s1191 = ssub.s32 512, 512
          %1192 = vsyncadd %s1183, %s1191
          %s1193 = smul.addr %s26, 4
          %s1194 = smul.addr %s1193, 128
          %s1195 = scalar_lea.hbm %s11, %s1194
          %s1196 = sshll.u32 %s1186, 4
          %s1197 = int_to_ptr.vmem [resolvable:$true] %s1196
          %1202 = dma.vmem_to_hbm [thread:$0]  %s1197, 512, %s1195, %s1183, 128, 128, 8
        $region72: #{tpu_custom_call.1} parent=63 // pred_fallthru
          _
      $region64: #{tpu_custom_call.1} parent=5 // pred_fallthru
        _
      %p1203 = scmp.le.s32.totalorder 2, %s21
      // Predicated region
      $region73: #{tpu_custom_call.1} parent=5 // pred_check
        %p1204 = pneg %p1203
      $region74: #{tpu_custom_call.1} parent=5 // pred_check_branch
        %1206 = sbr.rel (%p1204) target = $region76
      $region75: #{tpu_custom_call.1} parent=5 // pred_region
        %s1207 = ssub.s32 %s21, 2
        // Predicated region
        $region77: #{tpu_custom_call.1} parent=75 // pred_check
          %p1208 = pneg %p286
        $region78: #{tpu_custom_call.1} parent=75 // pred_check_branch
          %1210 = sbr.rel (%p1208) target = $region80
        $region79: #{tpu_custom_call.1} parent=75 // pred_region
          %s1211 = sand.u32 %s271, 1
          %s1212 = scalar_lea.sflag [#allocation4], %s1211
          %s1213 = sand.u32 %s271, 1
          %s1214 = smul.addr %s1213, 32
          %s1215 = scalar_lea.vmem [#allocation5], %s1214
          %1216 = dma.done %s1212, 512
        $region80: #{tpu_custom_call.1} parent=75 // pred_fallthru
          _
      $region76: #{tpu_custom_call.1} parent=5 // pred_fallthru
        _
    $region6: #{tpu_custom_call.1} parent=1 // loop_footer
      %s25 = sadd.s32 1, %s21
    $region7: #{tpu_custom_call.1} parent=1 // loop_footer_branch
      %20 = sbr.rel target = $region3
    $region8: #{tpu_custom_call.1} parent=1 // loop_exit
      _
    %1217 = vsyncpa [#allocation3], 1
    %s1218 = scalar_lea.sflag [#allocation3], 1
    %1219 = vsyncpa %s1218, 1
    %1220 = vsyncpa [#allocation4], 1
    %s1221 = scalar_lea.sflag [#allocation4], 1
    %1222 = vsyncpa %s1221, 1

</llo_original>
